<compile_context>
chip_gen: v6e
topology: v6e:2x2x1
jax: 0.10.0
libtpu: 0.0.40
codegen_flags: <defaults>
</compile_context>

<pallas_src>
import numpy as np
import jax
import jax.numpy as jnp
from jax import lax
from jax.experimental import pallas as pl
from jax.experimental.pallas import tpu as pltpu

# Module defaults + pysot cfg constants (deterministic, set in-script).
L = 4.0
MARGIN = 0.5
HARD_NEGATIVE_THS = 0.5
RANK_NUM_HARD_NEGATIVE_SAMPLES = 8

_INT32_MIN = -(2 ** 31)


def _rank_cls_kernel(x_ref, out_ref):
    # x_ref: (1, 1, 2*N) packed [scores | labels], N % 128 == 0 (lane-dense).
    n = x_ref.shape[-1] // 2
    score = x_ref[0, :, 0:n]          # (1, N) class-1 logits, f32
    label = x_ref[0, :, n:]           # (1, N) {1: pos, 0: neg, -1: ignore/pad}

    pos_mask = label == 1.0
    neg_mask = label == 0.0
    prob = jnp.exp(score)             # EUP

    num_pos = jnp.sum(jnp.where(pos_mask, 1.0, 0.0))
    num_neg = jnp.sum(jnp.where(neg_mask, 1.0, 0.0))
    # pos_value[0:num_pos] == all positive probs -> plain mean.
    pos_dist = (jnp.sum(jnp.where(pos_mask, prob, 0.0))
                / jnp.maximum(num_pos, 1.0))

    num_hard = jnp.sum(jnp.where(
        jnp.logical_and(neg_mask, prob > HARD_NEGATIVE_THS), 1.0, 0.0))
    valid = num_hard > 0.0            # torch: `if neg_idx2.sum() == 0: continue`

    # Default output: skipped batch -> loss 0, valid 0.
    out_ref[...] = jnp.zeros_like(out_ref)

    @pl.when(valid)
    def _():
        # k = num_pos (pos branch) or max(num_hard, 8) (neg-only branch);
        # torch's neg_value[0:k] silently truncates, so clamp to num_neg.
        k = jnp.where(num_pos > 0.0, num_pos,
                      jnp.maximum(num_hard,
                                  float(RANK_NUM_HARD_NEGATIVE_SAMPLES)))
        k = jnp.minimum(k, num_neg)

        # Monotone int32 key: order(key_int) == order(score) for all finite
        # floats; non-negatives (and padding) are parked at INT32_MIN.
        bits = pltpu.bitcast(score, jnp.int32)
        mono = jnp.where(bits < 0, bits ^ jnp.int32(0x7FFFFFFF), bits)
        key_int = jnp.where(neg_mask, mono, jnp.int32(_INT32_MIN))

        # Exact k-th largest negative score via bitwise binary lift:
        # 31 x (one (1,N) compare + one lane reduction).  O(31*N) total,
        # replacing the old O(N^2) pairwise rank.
        t = jnp.int32(_INT32_MIN)
        for b in range(30, -1, -1):
            cand = t + jnp.int32(1 << b)          # never overflows int32
            cnt = jnp.sum(jnp.where(key_int >= cand, 1.0, 0.0))
            t = jnp.where(cnt >= k, cand, t)

        # Exact top-k multiset = {strictly above t} + j copies of value t.
        strict = key_int > t
        c_gt = jnp.sum(jnp.where(strict, 1.0, 0.0))
        j = k - c_gt                                            # >= 1
        score_t = jnp.max(jnp.where(key_int == t, score, -jnp.inf))
        p_t = jnp.exp(score_t)

        # softmax-weighted sum over exactly the top-k negative probs
        m = jnp.max(jnp.where(neg_mask, prob, -jnp.inf))        # max selected prob
        e = jnp.where(strict, jnp.exp(prob - m), 0.0)
        e_t = jnp.exp(p_t - m)
        z = jnp.sum(e) + j * e_t
        neg_dist = (jnp.sum(jnp.where(strict, prob, 0.0) * e)
                    + j * p_t * e_t) / z

        target = jnp.where(num_pos > 0.0, pos_dist, 1.0)
        x = L * (neg_dist - target + MARGIN)
        # numerically stable log(1 + exp(x))
        loss = (jnp.maximum(x, 0.0) + jnp.log(1.0 + jnp.exp(-jnp.abs(x)))) / L

        lane = lax.broadcasted_iota(jnp.int32, (1, 128), 1)
        out_ref[0] = jnp.where(lane == 0, loss,
                               jnp.where(lane == 1, 1.0, 0.0)
                               ).astype(jnp.float32)


@jax.jit
def rank_cls_loss(inp, label):
    b = inp.shape[0]
    pred = inp.reshape(b, -1, 2)                          # same view as torch
    scores = pred[..., 1].astype(jnp.float32)             # (B, N) class-1 logits
    lab = label.reshape(b, -1).astype(jnp.float32)        # (B, N)
    n = scores.shape[1]

    # Pad N to a lane multiple; padding labelled -1 (ignore) so masks drop it.
    n_pad = ((n + 127) // 128) * 128
    if n_pad != n:
        scores = jnp.pad(scores, ((0, 0), (0, n_pad - n)))
        lab = jnp.pad(lab, ((0, 0), (0, n_pad - n)), constant_values=-1.0)

    # Single lane-dense input slab per batch: [scores | labels].
    packed = jnp.concatenate([scores, lab], axis=1).reshape(b, 1, 2 * n_pad)

    out = pl.pallas_call(
        _rank_cls_kernel,
        grid=(b,),
        in_specs=[pl.BlockSpec((1, 1, 2 * n_pad), lambda i: (i, 0, 0))],
        out_specs=pl.BlockSpec((1, 1, 128), lambda i: (i, 0, 0)),
        out_shape=jax.ShapeDtypeStruct((b, 1, 128), jnp.float32),
        compiler_params=pltpu.CompilerParams(
            dimension_semantics=("parallel",)),
    )(packed)

    loss_b = out[:, 0, 0]                                 # (B,)
    valid_b = out[:, 0, 1]                                # (B,)
    n_valid = jnp.sum(valid_b)
    # mean over non-skipped batches; 0.0 if every batch was skipped
    return jnp.where(n_valid > 0.0,
                     jnp.sum(loss_b) / jnp.maximum(n_valid, 1.0),
                     0.0)


def _reference(inp, label):
    """Pure numpy re-implementation of the PyTorch forward (for verification)."""
    inp = np.asarray(inp, np.float32)
    label = np.asarray(label, np.float32)
    B = inp.shape[0]
    pred = inp.reshape(B, -1, 2)
    lab = label.reshape(B, -1)
    losses = []
    for b in range(B):
        pos = np.where(lab[b] == 1)[0]
        neg = np.where(lab[b] == 0)[0]
        neg_prob = np.exp(pred[b, neg, 1])
        if (neg_prob > HARD_NEGATIVE_THS).sum() == 0:
            continue
        neg_value = np.sort(neg_prob)[::-1]
        if len(pos) > 0:
            pos_prob = np.exp(pred[b, pos, 1])
            num_pos = len(pos)
            nv = neg_value[:num_pos]
            pv = np.sort(pos_prob)[::-1][:num_pos]
            q = np.exp(nv - nv.max()); q /= q.sum()
            neg_dist = float(np.sum(nv * q))
            pos_dist = float(np.sum(pv) / len(pv))
            x = L * (neg_dist - pos_dist + MARGIN)
        else:
            num_neg = max(int((neg_prob > HARD_NEGATIVE_THS).sum()),
                          RANK_NUM_HARD_NEGATIVE_SAMPLES)
            nv = neg_value[:num_neg]
            q = np.exp(nv - nv.max()); q /= q.sum()
            neg_dist = float(np.sum(nv * q))
            x = L * (neg_dist - 1.0 + MARGIN)
        loss = (max(x, 0.0) + np.log1p(np.exp(-abs(x)))) / L   # stable softplus
        losses.append(float(loss))
    return float(np.mean(losses)) if losses else 0.0


if __name__ == "__main__":
    B, C, H, W = 2, 4, 16, 16
    N = (C * H * W) // 2                                  # 512
    key = jax.random.PRNGKey(0)
    k1, k2 = jax.random.split(key)
    x = jax.random.normal(k1, (B, C, H, W), jnp.float32)
    u = jax.random.uniform(k2, (B, N))
    label = jnp.where(u < 0.5, 0.0, -1.0)                 # negatives / ignore
    label = label.at[0, :12].set(1.0)                     # batch 0: has positives
    # batch 1 has no positives -> exercises the negative-only branch

    out = jax.block_until_ready(rank_cls_loss(x, label))
    ref = _reference(np.asarray(x), np.asarray(label))
    assert abs(float(out) - ref) < 1e-3 * max(1.0, abs(ref)), (float(out), ref)
    print("KERNEL_OK")
</pallas_src>

<mosaic_0001>
module attributes {stable_mosaic.version = 11 : i64} {
  func.func @_rank_cls_kernel(%arg0: i32, %arg1: memref<1x1x1024xf32, #tpu.memory_space<vmem>>, %arg2: memref<1x1x128xf32, #tpu.memory_space<vmem>>) attributes {dimension_semantics = [#tpu.dimension_semantics<parallel>], iteration_bounds = array<i64: 2>, scalar_prefetch = 0 : i64, scratch_operands = 0 : i64, tpu.core_type = #tpu.core_type<tc>, window_params = [{transform_indices = @transform_0, window_bounds = array<i64: 1, 1, 1024>}, {transform_indices = @transform_1, window_bounds = array<i64: 1, 1, 128>}]} {
    %c0 = arith.constant 0 : index
    %c0_0 = arith.constant 0 : index
    %c0_1 = arith.constant 0 : index
    %0 = vector.load %arg1[%c0, %c0_0, %c0_1] : memref<1x1x1024xf32, #tpu.memory_space<vmem>>, vector<1x1x512xf32>
    %1 = vector.shape_cast %0 : vector<1x1x512xf32> to vector<1x512xf32>
    %c0_2 = arith.constant 0 : index
    %c0_3 = arith.constant 0 : index
    %c512 = arith.constant 512 : index
    %2 = vector.load %arg1[%c0_2, %c0_3, %c512] : memref<1x1x1024xf32, #tpu.memory_space<vmem>>, vector<1x1x512xf32>
    %3 = vector.shape_cast %2 : vector<1x1x512xf32> to vector<1x512xf32>
    %cst = arith.constant 1.000000e+00 : f32
    %4 = vector.broadcast %cst : f32 to vector<1x512xf32>
    %5 = arith.cmpf oeq, %3, %4 : vector<1x512xf32>
    %cst_4 = arith.constant 0.000000e+00 : f32
    %6 = vector.broadcast %cst_4 : f32 to vector<1x512xf32>
    %7 = arith.cmpf oeq, %3, %6 : vector<1x512xf32>
    %8 = math.exp %1 : vector<1x512xf32>
    %cst_5 = arith.constant 1.000000e+00 : f32
    %cst_6 = arith.constant 0.000000e+00 : f32
    %9 = vector.broadcast %cst_5 : f32 to vector<1x512xf32>
    %10 = vector.broadcast %cst_6 : f32 to vector<1x512xf32>
    %11 = arith.select %5, %9, %10 : vector<1x512xi1>, vector<1x512xf32>
    %12 = vector.shape_cast %11 : vector<1x512xf32> to vector<1x1x512xf32>
    %cst_7 = arith.constant dense<0.000000e+00> : vector<1xf32>
    %13 = vector.multi_reduction <add>, %12, %cst_7 [1, 2] : vector<1x1x512xf32> to vector<1xf32>
    %14 = vector.shape_cast %13 : vector<1xf32> to vector<1x1x1xf32>
    %15 = vector.extract %14[0, 0, 0] : f32 from vector<1x1x1xf32>
    %cst_8 = arith.constant 1.000000e+00 : f32
    %cst_9 = arith.constant 0.000000e+00 : f32
    %16 = vector.broadcast %cst_8 : f32 to vector<1x512xf32>
    %17 = vector.broadcast %cst_9 : f32 to vector<1x512xf32>
    %18 = arith.select %7, %16, %17 : vector<1x512xi1>, vector<1x512xf32>
    %19 = vector.shape_cast %18 : vector<1x512xf32> to vector<1x1x512xf32>
    %cst_10 = arith.constant dense<0.000000e+00> : vector<1xf32>
    %20 = vector.multi_reduction <add>, %19, %cst_10 [1, 2] : vector<1x1x512xf32> to vector<1xf32>
    %21 = vector.shape_cast %20 : vector<1xf32> to vector<1x1x1xf32>
    %22 = vector.extract %21[0, 0, 0] : f32 from vector<1x1x1xf32>
    %cst_11 = arith.constant 0.000000e+00 : f32
    %23 = vector.broadcast %cst_11 : f32 to vector<1x512xf32>
    %24 = arith.select %5, %8, %23 : vector<1x512xi1>, vector<1x512xf32>
    %25 = vector.shape_cast %24 : vector<1x512xf32> to vector<1x1x512xf32>
    %cst_12 = arith.constant dense<0.000000e+00> : vector<1xf32>
    %26 = vector.multi_reduction <add>, %25, %cst_12 [1, 2] : vector<1x1x512xf32> to vector<1xf32>
    %27 = vector.shape_cast %26 : vector<1xf32> to vector<1x1x1xf32>
    %28 = vector.extract %27[0, 0, 0] : f32 from vector<1x1x1xf32>
    %cst_13 = arith.constant 1.000000e+00 : f32
    %29 = arith.maximumf %15, %cst_13 : f32
    %30 = arith.divf %28, %29 : f32
    %cst_14 = arith.constant 5.000000e-01 : f32
    %31 = vector.broadcast %cst_14 : f32 to vector<1x512xf32>
    %32 = arith.cmpf ogt, %8, %31 : vector<1x512xf32>
    %33 = arith.andi %7, %32 : vector<1x512xi1>
    %cst_15 = arith.constant 1.000000e+00 : f32
    %cst_16 = arith.constant 0.000000e+00 : f32
    %34 = vector.broadcast %cst_15 : f32 to vector<1x512xf32>
    %35 = vector.broadcast %cst_16 : f32 to vector<1x512xf32>
    %36 = arith.select %33, %34, %35 : vector<1x512xi1>, vector<1x512xf32>
    %37 = vector.shape_cast %36 : vector<1x512xf32> to vector<1x1x512xf32>
    %cst_17 = arith.constant dense<0.000000e+00> : vector<1xf32>
    %38 = vector.multi_reduction <add>, %37, %cst_17 [1, 2] : vector<1x1x512xf32> to vector<1xf32>
    %39 = vector.shape_cast %38 : vector<1xf32> to vector<1x1x1xf32>
    %40 = vector.extract %39[0, 0, 0] : f32 from vector<1x1x1xf32>
    %cst_18 = arith.constant 0.000000e+00 : f32
    %41 = arith.cmpf ogt, %40, %cst_18 : f32
    %cst_19 = arith.constant 0.000000e+00 : f32
    %42 = vector.broadcast %cst_19 : f32 to vector<1x1x128xf32>
    %c0_20 = arith.constant 0 : index
    %c0_21 = arith.constant 0 : index
    %c0_22 = arith.constant 0 : index
    %43 = vector.load %arg2[%c0_20, %c0_21, %c0_22] : memref<1x1x128xf32, #tpu.memory_space<vmem>>, vector<1x1x128xf32>
    tpu.vector_store %arg2[%c0_20, %c0_21, %c0_22], %42 {strides = array<i32>} : memref<1x1x128xf32, #tpu.memory_space<vmem>>, vector<1x1x128xf32>,
    %44 = arith.extui %41 : i1 to i32
    %c0_i32 = arith.constant 0 : i32
    %45 = arith.cmpi ne, %44, %c0_i32 : i32
    scf.if %45 {
      %cst_23 = arith.constant 0.000000e+00 : f32
      %46 = arith.cmpf ogt, %15, %cst_23 : f32
      %cst_24 = arith.constant 8.000000e+00 : f32
      %47 = arith.maximumf %40, %cst_24 : f32
      %48 = arith.select %46, %15, %47 : f32
      %49 = arith.minimumf %48, %22 : f32
      %50 = tpu.bitcast %1 : vector<1x512xf32> -> vector<1x512xi32>
      %c0_i32_25 = arith.constant 0 : i32
      %51 = vector.broadcast %c0_i32_25 : i32 to vector<1x512xi32>
      %52 = arith.cmpi slt, %50, %51 : vector<1x512xi32>
      %c2147483647_i32 = arith.constant 2147483647 : i32
      %53 = vector.broadcast %c2147483647_i32 : i32 to vector<1x512xi32>
      %54 = arith.xori %50, %53 : vector<1x512xi32>
      %55 = arith.select %52, %54, %50 : vector<1x512xi1>, vector<1x512xi32>
      %c-2147483648_i32 = arith.constant -2147483648 : i32
      %56 = vector.broadcast %c-2147483648_i32 : i32 to vector<1x512xi32>
      %57 = arith.select %7, %55, %56 : vector<1x512xi1>, vector<1x512xi32>
      %c-2147483648_i32_26 = arith.constant -2147483648 : i32
      %c1073741824_i32 = arith.constant 1073741824 : i32
      %58 = arith.addi %c-2147483648_i32_26, %c1073741824_i32 : i32
      %59 = vector.broadcast %58 : i32 to vector<1x512xi32>
      %60 = arith.cmpi sge, %57, %59 : vector<1x512xi32>
      %cst_27 = arith.constant 1.000000e+00 : f32
      %cst_28 = arith.constant 0.000000e+00 : f32
      %61 = vector.broadcast %cst_27 : f32 to vector<1x512xf32>
      %62 = vector.broadcast %cst_28 : f32 to vector<1x512xf32>
      %63 = arith.select %60, %61, %62 : vector<1x512xi1>, vector<1x512xf32>
      %64 = vector.shape_cast %63 : vector<1x512xf32> to vector<1x1x512xf32>
      %cst_29 = arith.constant dense<0.000000e+00> : vector<1xf32>
      %65 = vector.multi_reduction <add>, %64, %cst_29 [1, 2] : vector<1x1x512xf32> to vector<1xf32>
      %66 = vector.shape_cast %65 : vector<1xf32> to vector<1x1x1xf32>
      %67 = vector.extract %66[0, 0, 0] : f32 from vector<1x1x1xf32>
      %68 = arith.cmpf oge, %67, %49 : f32
      %c-2147483648_i32_30 = arith.constant -2147483648 : i32
      %69 = arith.select %68, %58, %c-2147483648_i32_30 : i32
      %c536870912_i32 = arith.constant 536870912 : i32
      %70 = arith.addi %69, %c536870912_i32 : i32
      %71 = vector.broadcast %70 : i32 to vector<1x512xi32>
      %72 = arith.cmpi sge, %57, %71 : vector<1x512xi32>
      %cst_31 = arith.constant 1.000000e+00 : f32
      %cst_32 = arith.constant 0.000000e+00 : f32
      %73 = vector.broadcast %cst_31 : f32 to vector<1x512xf32>
      %74 = vector.broadcast %cst_32 : f32 to vector<1x512xf32>
      %75 = arith.select %72, %73, %74 : vector<1x512xi1>, vector<1x512xf32>
      %76 = vector.shape_cast %75 : vector<1x512xf32> to vector<1x1x512xf32>
      %cst_33 = arith.constant dense<0.000000e+00> : vector<1xf32>
      %77 = vector.multi_reduction <add>, %76, %cst_33 [1, 2] : vector<1x1x512xf32> to vector<1xf32>
      %78 = vector.shape_cast %77 : vector<1xf32> to vector<1x1x1xf32>
      %79 = vector.extract %78[0, 0, 0] : f32 from vector<1x1x1xf32>
      %80 = arith.cmpf oge, %79, %49 : f32
      %81 = arith.select %80, %70, %69 : i32
      %c268435456_i32 = arith.constant 268435456 : i32
      %82 = arith.addi %81, %c268435456_i32 : i32
      %83 = vector.broadcast %82 : i32 to vector<1x512xi32>
      %84 = arith.cmpi sge, %57, %83 : vector<1x512xi32>
      %cst_34 = arith.constant 1.000000e+00 : f32
      %cst_35 = arith.constant 0.000000e+00 : f32
      %85 = vector.broadcast %cst_34 : f32 to vector<1x512xf32>
      %86 = vector.broadcast %cst_35 : f32 to vector<1x512xf32>
      %87 = arith.select %84, %85, %86 : vector<1x512xi1>, vector<1x512xf32>
      %88 = vector.shape_cast %87 : vector<1x512xf32> to vector<1x1x512xf32>
      %cst_36 = arith.constant dense<0.000000e+00> : vector<1xf32>
      %89 = vector.multi_reduction <add>, %88, %cst_36 [1, 2] : vector<1x1x512xf32> to vector<1xf32>
      %90 = vector.shape_cast %89 : vector<1xf32> to vector<1x1x1xf32>
      %91 = vector.extract %90[0, 0, 0] : f32 from vector<1x1x1xf32>
      %92 = arith.cmpf oge, %91, %49 : f32
      %93 = arith.select %92, %82, %81 : i32
      %c134217728_i32 = arith.constant 134217728 : i32
      %94 = arith.addi %93, %c134217728_i32 : i32
      %95 = vector.broadcast %94 : i32 to vector<1x512xi32>
      %96 = arith.cmpi sge, %57, %95 : vector<1x512xi32>
      %cst_37 = arith.constant 1.000000e+00 : f32
      %cst_38 = arith.constant 0.000000e+00 : f32
      %97 = vector.broadcast %cst_37 : f32 to vector<1x512xf32>
      %98 = vector.broadcast %cst_38 : f32 to vector<1x512xf32>
      %99 = arith.select %96, %97, %98 : vector<1x512xi1>, vector<1x512xf32>
      %100 = vector.shape_cast %99 : vector<1x512xf32> to vector<1x1x512xf32>
      %cst_39 = arith.constant dense<0.000000e+00> : vector<1xf32>
      %101 = vector.multi_reduction <add>, %100, %cst_39 [1, 2] : vector<1x1x512xf32> to vector<1xf32>
      %102 = vector.shape_cast %101 : vector<1xf32> to vector<1x1x1xf32>
      %103 = vector.extract %102[0, 0, 0] : f32 from vector<1x1x1xf32>
      %104 = arith.cmpf oge, %103, %49 : f32
      %105 = arith.select %104, %94, %93 : i32
      %c67108864_i32 = arith.constant 67108864 : i32
      %106 = arith.addi %105, %c67108864_i32 : i32
      %107 = vector.broadcast %106 : i32 to vector<1x512xi32>
      %108 = arith.cmpi sge, %57, %107 : vector<1x512xi32>
      %cst_40 = arith.constant 1.000000e+00 : f32
      %cst_41 = arith.constant 0.000000e+00 : f32
      %109 = vector.broadcast %cst_40 : f32 to vector<1x512xf32>
      %110 = vector.broadcast %cst_41 : f32 to vector<1x512xf32>
      %111 = arith.select %108, %109, %110 : vector<1x512xi1>, vector<1x512xf32>
      %112 = vector.shape_cast %111 : vector<1x512xf32> to vector<1x1x512xf32>
      %cst_42 = arith.constant dense<0.000000e+00> : vector<1xf32>
      %113 = vector.multi_reduction <add>, %112, %cst_42 [1, 2] : vector<1x1x512xf32> to vector<1xf32>
      %114 = vector.shape_cast %113 : vector<1xf32> to vector<1x1x1xf32>
      %115 = vector.extract %114[0, 0, 0] : f32 from vector<1x1x1xf32>
      %116 = arith.cmpf oge, %115, %49 : f32
      %117 = arith.select %116, %106, %105 : i32
      %c33554432_i32 = arith.constant 33554432 : i32
      %118 = arith.addi %117, %c33554432_i32 : i32
      %119 = vector.broadcast %118 : i32 to vector<1x512xi32>
      %120 = arith.cmpi sge, %57, %119 : vector<1x512xi32>
      %cst_43 = arith.constant 1.000000e+00 : f32
      %cst_44 = arith.constant 0.000000e+00 : f32
      %121 = vector.broadcast %cst_43 : f32 to vector<1x512xf32>
      %122 = vector.broadcast %cst_44 : f32 to vector<1x512xf32>
      %123 = arith.select %120, %121, %122 : vector<1x512xi1>, vector<1x512xf32>
      %124 = vector.shape_cast %123 : vector<1x512xf32> to vector<1x1x512xf32>
      %cst_45 = arith.constant dense<0.000000e+00> : vector<1xf32>
      %125 = vector.multi_reduction <add>, %124, %cst_45 [1, 2] : vector<1x1x512xf32> to vector<1xf32>
      %126 = vector.shape_cast %125 : vector<1xf32> to vector<1x1x1xf32>
      %127 = vector.extract %126[0, 0, 0] : f32 from vector<1x1x1xf32>
      %128 = arith.cmpf oge, %127, %49 : f32
      %129 = arith.select %128, %118, %117 : i32
      %c16777216_i32 = arith.constant 16777216 : i32
      %130 = arith.addi %129, %c16777216_i32 : i32
      %131 = vector.broadcast %130 : i32 to vector<1x512xi32>
      %132 = arith.cmpi sge, %57, %131 : vector<1x512xi32>
      %cst_46 = arith.constant 1.000000e+00 : f32
      %cst_47 = arith.constant 0.000000e+00 : f32
      %133 = vector.broadcast %cst_46 : f32 to vector<1x512xf32>
      %134 = vector.broadcast %cst_47 : f32 to vector<1x512xf32>
      %135 = arith.select %132, %133, %134 : vector<1x512xi1>, vector<1x512xf32>
      %136 = vector.shape_cast %135 : vector<1x512xf32> to vector<1x1x512xf32>
      %cst_48 = arith.constant dense<0.000000e+00> : vector<1xf32>
      %137 = vector.multi_reduction <add>, %136, %cst_48 [1, 2] : vector<1x1x512xf32> to vector<1xf32>
      %138 = vector.shape_cast %137 : vector<1xf32> to vector<1x1x1xf32>
      %139 = vector.extract %138[0, 0, 0] : f32 from vector<1x1x1xf32>
      %140 = arith.cmpf oge, %139, %49 : f32
      %141 = arith.select %140, %130, %129 : i32
      %c8388608_i32 = arith.constant 8388608 : i32
      %142 = arith.addi %141, %c8388608_i32 : i32
      %143 = vector.broadcast %142 : i32 to vector<1x512xi32>
      %144 = arith.cmpi sge, %57, %143 : vector<1x512xi32>
      %cst_49 = arith.constant 1.000000e+00 : f32
      %cst_50 = arith.constant 0.000000e+00 : f32
      %145 = vector.broadcast %cst_49 : f32 to vector<1x512xf32>
      %146 = vector.broadcast %cst_50 : f32 to vector<1x512xf32>
      %147 = arith.select %144, %145, %146 : vector<1x512xi1>, vector<1x512xf32>
      %148 = vector.shape_cast %147 : vector<1x512xf32> to vector<1x1x512xf32>
      %cst_51 = arith.constant dense<0.000000e+00> : vector<1xf32>
      %149 = vector.multi_reduction <add>, %148, %cst_51 [1, 2] : vector<1x1x512xf32> to vector<1xf32>
      %150 = vector.shape_cast %149 : vector<1xf32> to vector<1x1x1xf32>
      %151 = vector.extract %150[0, 0, 0] : f32 from vector<1x1x1xf32>
      %152 = arith.cmpf oge, %151, %49 : f32
      %153 = arith.select %152, %142, %141 : i32
      %c4194304_i32 = arith.constant 4194304 : i32
      %154 = arith.addi %153, %c4194304_i32 : i32
      %155 = vector.broadcast %154 : i32 to vector<1x512xi32>
      %156 = arith.cmpi sge, %57, %155 : vector<1x512xi32>
      %cst_52 = arith.constant 1.000000e+00 : f32
      %cst_53 = arith.constant 0.000000e+00 : f32
      %157 = vector.broadcast %cst_52 : f32 to vector<1x512xf32>
      %158 = vector.broadcast %cst_53 : f32 to vector<1x512xf32>
      %159 = arith.select %156, %157, %158 : vector<1x512xi1>, vector<1x512xf32>
      %160 = vector.shape_cast %159 : vector<1x512xf32> to vector<1x1x512xf32>
      %cst_54 = arith.constant dense<0.000000e+00> : vector<1xf32>
      %161 = vector.multi_reduction <add>, %160, %cst_54 [1, 2] : vector<1x1x512xf32> to vector<1xf32>
      %162 = vector.shape_cast %161 : vector<1xf32> to vector<1x1x1xf32>
      %163 = vector.extract %162[0, 0, 0] : f32 from vector<1x1x1xf32>
      %164 = arith.cmpf oge, %163, %49 : f32
      %165 = arith.select %164, %154, %153 : i32
      %c2097152_i32 = arith.constant 2097152 : i32
      %166 = arith.addi %165, %c2097152_i32 : i32
      %167 = vector.broadcast %166 : i32 to vector<1x512xi32>
      %168 = arith.cmpi sge, %57, %167 : vector<1x512xi32>
      %cst_55 = arith.constant 1.000000e+00 : f32
      %cst_56 = arith.constant 0.000000e+00 : f32
      %169 = vector.broadcast %cst_55 : f32 to vector<1x512xf32>
      %170 = vector.broadcast %cst_56 : f32 to vector<1x512xf32>
      %171 = arith.select %168, %169, %170 : vector<1x512xi1>, vector<1x512xf32>
      %172 = vector.shape_cast %171 : vector<1x512xf32> to vector<1x1x512xf32>
      %cst_57 = arith.constant dense<0.000000e+00> : vector<1xf32>
      %173 = vector.multi_reduction <add>, %172, %cst_57 [1, 2] : vector<1x1x512xf32> to vector<1xf32>
      %174 = vector.shape_cast %173 : vector<1xf32> to vector<1x1x1xf32>
      %175 = vector.extract %174[0, 0, 0] : f32 from vector<1x1x1xf32>
      %176 = arith.cmpf oge, %175, %49 : f32
      %177 = arith.select %176, %166, %165 : i32
      %c1048576_i32 = arith.constant 1048576 : i32
      %178 = arith.addi %177, %c1048576_i32 : i32
      %179 = vector.broadcast %178 : i32 to vector<1x512xi32>
      %180 = arith.cmpi sge, %57, %179 : vector<1x512xi32>
      %cst_58 = arith.constant 1.000000e+00 : f32
      %cst_59 = arith.constant 0.000000e+00 : f32
      %181 = vector.broadcast %cst_58 : f32 to vector<1x512xf32>
      %182 = vector.broadcast %cst_59 : f32 to vector<1x512xf32>
      %183 = arith.select %180, %181, %182 : vector<1x512xi1>, vector<1x512xf32>
      %184 = vector.shape_cast %183 : vector<1x512xf32> to vector<1x1x512xf32>
      %cst_60 = arith.constant dense<0.000000e+00> : vector<1xf32>
      %185 = vector.multi_reduction <add>, %184, %cst_60 [1, 2] : vector<1x1x512xf32> to vector<1xf32>
      %186 = vector.shape_cast %185 : vector<1xf32> to vector<1x1x1xf32>
      %187 = vector.extract %186[0, 0, 0] : f32 from vector<1x1x1xf32>
      %188 = arith.cmpf oge, %187, %49 : f32
      %189 = arith.select %188, %178, %177 : i32
      %c524288_i32 = arith.constant 524288 : i32
      %190 = arith.addi %189, %c524288_i32 : i32
      %191 = vector.broadcast %190 : i32 to vector<1x512xi32>
      %192 = arith.cmpi sge, %57, %191 : vector<1x512xi32>
      %cst_61 = arith.constant 1.000000e+00 : f32
      %cst_62 = arith.constant 0.000000e+00 : f32
      %193 = vector.broadcast %cst_61 : f32 to vector<1x512xf32>
      %194 = vector.broadcast %cst_62 : f32 to vector<1x512xf32>
      %195 = arith.select %192, %193, %194 : vector<1x512xi1>, vector<1x512xf32>
      %196 = vector.shape_cast %195 : vector<1x512xf32> to vector<1x1x512xf32>
      %cst_63 = arith.constant dense<0.000000e+00> : vector<1xf32>
      %197 = vector.multi_reduction <add>, %196, %cst_63 [1, 2] : vector<1x1x512xf32> to vector<1xf32>
      %198 = vector.shape_cast %197 : vector<1xf32> to vector<1x1x1xf32>
      %199 = vector.extract %198[0, 0, 0] : f32 from vector<1x1x1xf32>
      %200 = arith.cmpf oge, %199, %49 : f32
      %201 = arith.select %200, %190, %189 : i32
      %c262144_i32 = arith.constant 262144 : i32
      %202 = arith.addi %201, %c262144_i32 : i32
      %203 = vector.broadcast %202 : i32 to vector<1x512xi32>
      %204 = arith.cmpi sge, %57, %203 : vector<1x512xi32>
      %cst_64 = arith.constant 1.000000e+00 : f32
      %cst_65 = arith.constant 0.000000e+00 : f32
      %205 = vector.broadcast %cst_64 : f32 to vector<1x512xf32>
      %206 = vector.broadcast %cst_65 : f32 to vector<1x512xf32>
      %207 = arith.select %204, %205, %206 : vector<1x512xi1>, vector<1x512xf32>
      %208 = vector.shape_cast %207 : vector<1x512xf32> to vector<1x1x512xf32>
      %cst_66 = arith.constant dense<0.000000e+00> : vector<1xf32>
      %209 = vector.multi_reduction <add>, %208, %cst_66 [1, 2] : vector<1x1x512xf32> to vector<1xf32>
      %210 = vector.shape_cast %209 : vector<1xf32> to vector<1x1x1xf32>
      %211 = vector.extract %210[0, 0, 0] : f32 from vector<1x1x1xf32>
      %212 = arith.cmpf oge, %211, %49 : f32
      %213 = arith.select %212, %202, %201 : i32
      %c131072_i32 = arith.constant 131072 : i32
      %214 = arith.addi %213, %c131072_i32 : i32
      %215 = vector.broadcast %214 : i32 to vector<1x512xi32>
      %216 = arith.cmpi sge, %57, %215 : vector<1x512xi32>
      %cst_67 = arith.constant 1.000000e+00 : f32
      %cst_68 = arith.constant 0.000000e+00 : f32
      %217 = vector.broadcast %cst_67 : f32 to vector<1x512xf32>
      %218 = vector.broadcast %cst_68 : f32 to vector<1x512xf32>
      %219 = arith.select %216, %217, %218 : vector<1x512xi1>, vector<1x512xf32>
      %220 = vector.shape_cast %219 : vector<1x512xf32> to vector<1x1x512xf32>
      %cst_69 = arith.constant dense<0.000000e+00> : vector<1xf32>
      %221 = vector.multi_reduction <add>, %220, %cst_69 [1, 2] : vector<1x1x512xf32> to vector<1xf32>
      %222 = vector.shape_cast %221 : vector<1xf32> to vector<1x1x1xf32>
      %223 = vector.extract %222[0, 0, 0] : f32 from vector<1x1x1xf32>
      %224 = arith.cmpf oge, %223, %49 : f32
      %225 = arith.select %224, %214, %213 : i32
      %c65536_i32 = arith.constant 65536 : i32
      %226 = arith.addi %225, %c65536_i32 : i32
      %227 = vector.broadcast %226 : i32 to vector<1x512xi32>
      %228 = arith.cmpi sge, %57, %227 : vector<1x512xi32>
      %cst_70 = arith.constant 1.000000e+00 : f32
      %cst_71 = arith.constant 0.000000e+00 : f32
      %229 = vector.broadcast %cst_70 : f32 to vector<1x512xf32>
      %230 = vector.broadcast %cst_71 : f32 to vector<1x512xf32>
      %231 = arith.select %228, %229, %230 : vector<1x512xi1>, vector<1x512xf32>
      %232 = vector.shape_cast %231 : vector<1x512xf32> to vector<1x1x512xf32>
      %cst_72 = arith.constant dense<0.000000e+00> : vector<1xf32>
      %233 = vector.multi_reduction <add>, %232, %cst_72 [1, 2] : vector<1x1x512xf32> to vector<1xf32>
      %234 = vector.shape_cast %233 : vector<1xf32> to vector<1x1x1xf32>
      %235 = vector.extract %234[0, 0, 0] : f32 from vector<1x1x1xf32>
      %236 = arith.cmpf oge, %235, %49 : f32
      %237 = arith.select %236, %226, %225 : i32
      %c32768_i32 = arith.constant 32768 : i32
      %238 = arith.addi %237, %c32768_i32 : i32
      %239 = vector.broadcast %238 : i32 to vector<1x512xi32>
      %240 = arith.cmpi sge, %57, %239 : vector<1x512xi32>
      %cst_73 = arith.constant 1.000000e+00 : f32
      %cst_74 = arith.constant 0.000000e+00 : f32
      %241 = vector.broadcast %cst_73 : f32 to vector<1x512xf32>
      %242 = vector.broadcast %cst_74 : f32 to vector<1x512xf32>
      %243 = arith.select %240, %241, %242 : vector<1x512xi1>, vector<1x512xf32>
      %244 = vector.shape_cast %243 : vector<1x512xf32> to vector<1x1x512xf32>
      %cst_75 = arith.constant dense<0.000000e+00> : vector<1xf32>
      %245 = vector.multi_reduction <add>, %244, %cst_75 [1, 2] : vector<1x1x512xf32> to vector<1xf32>
      %246 = vector.shape_cast %245 : vector<1xf32> to vector<1x1x1xf32>
      %247 = vector.extract %246[0, 0, 0] : f32 from vector<1x1x1xf32>
      %248 = arith.cmpf oge, %247, %49 : f32
      %249 = arith.select %248, %238, %237 : i32
      %c16384_i32 = arith.constant 16384 : i32
      %250 = arith.addi %249, %c16384_i32 : i32
      %251 = vector.broadcast %250 : i32 to vector<1x512xi32>
      %252 = arith.cmpi sge, %57, %251 : vector<1x512xi32>
      %cst_76 = arith.constant 1.000000e+00 : f32
      %cst_77 = arith.constant 0.000000e+00 : f32
      %253 = vector.broadcast %cst_76 : f32 to vector<1x512xf32>
      %254 = vector.broadcast %cst_77 : f32 to vector<1x512xf32>
      %255 = arith.select %252, %253, %254 : vector<1x512xi1>, vector<1x512xf32>
      %256 = vector.shape_cast %255 : vector<1x512xf32> to vector<1x1x512xf32>
      %cst_78 = arith.constant dense<0.000000e+00> : vector<1xf32>
      %257 = vector.multi_reduction <add>, %256, %cst_78 [1, 2] : vector<1x1x512xf32> to vector<1xf32>
      %258 = vector.shape_cast %257 : vector<1xf32> to vector<1x1x1xf32>
      %259 = vector.extract %258[0, 0, 0] : f32 from vector<1x1x1xf32>
      %260 = arith.cmpf oge, %259, %49 : f32
      %261 = arith.select %260, %250, %249 : i32
      %c8192_i32 = arith.constant 8192 : i32
      %262 = arith.addi %261, %c8192_i32 : i32
      %263 = vector.broadcast %262 : i32 to vector<1x512xi32>
      %264 = arith.cmpi sge, %57, %263 : vector<1x512xi32>
      %cst_79 = arith.constant 1.000000e+00 : f32
      %cst_80 = arith.constant 0.000000e+00 : f32
      %265 = vector.broadcast %cst_79 : f32 to vector<1x512xf32>
      %266 = vector.broadcast %cst_80 : f32 to vector<1x512xf32>
      %267 = arith.select %264, %265, %266 : vector<1x512xi1>, vector<1x512xf32>
      %268 = vector.shape_cast %267 : vector<1x512xf32> to vector<1x1x512xf32>
      %cst_81 = arith.constant dense<0.000000e+00> : vector<1xf32>
      %269 = vector.multi_reduction <add>, %268, %cst_81 [1, 2] : vector<1x1x512xf32> to vector<1xf32>
      %270 = vector.shape_cast %269 : vector<1xf32> to vector<1x1x1xf32>
      %271 = vector.extract %270[0, 0, 0] : f32 from vector<1x1x1xf32>
      %272 = arith.cmpf oge, %271, %49 : f32
      %273 = arith.select %272, %262, %261 : i32
      %c4096_i32 = arith.constant 4096 : i32
      %274 = arith.addi %273, %c4096_i32 : i32
      %275 = vector.broadcast %274 : i32 to vector<1x512xi32>
      %276 = arith.cmpi sge, %57, %275 : vector<1x512xi32>
      %cst_82 = arith.constant 1.000000e+00 : f32
      %cst_83 = arith.constant 0.000000e+00 : f32
      %277 = vector.broadcast %cst_82 : f32 to vector<1x512xf32>
      %278 = vector.broadcast %cst_83 : f32 to vector<1x512xf32>
      %279 = arith.select %276, %277, %278 : vector<1x512xi1>, vector<1x512xf32>
      %280 = vector.shape_cast %279 : vector<1x512xf32> to vector<1x1x512xf32>
      %cst_84 = arith.constant dense<0.000000e+00> : vector<1xf32>
      %281 = vector.multi_reduction <add>, %280, %cst_84 [1, 2] : vector<1x1x512xf32> to vector<1xf32>
      %282 = vector.shape_cast %281 : vector<1xf32> to vector<1x1x1xf32>
      %283 = vector.extract %282[0, 0, 0] : f32 from vector<1x1x1xf32>
      %284 = arith.cmpf oge, %283, %49 : f32
      %285 = arith.select %284, %274, %273 : i32
      %c2048_i32 = arith.constant 2048 : i32
      %286 = arith.addi %285, %c2048_i32 : i32
      %287 = vector.broadcast %286 : i32 to vector<1x512xi32>
      %288 = arith.cmpi sge, %57, %287 : vector<1x512xi32>
      %cst_85 = arith.constant 1.000000e+00 : f32
      %cst_86 = arith.constant 0.000000e+00 : f32
      %289 = vector.broadcast %cst_85 : f32 to vector<1x512xf32>
      %290 = vector.broadcast %cst_86 : f32 to vector<1x512xf32>
      %291 = arith.select %288, %289, %290 : vector<1x512xi1>, vector<1x512xf32>
      %292 = vector.shape_cast %291 : vector<1x512xf32> to vector<1x1x512xf32>
      %cst_87 = arith.constant dense<0.000000e+00> : vector<1xf32>
      %293 = vector.multi_reduction <add>, %292, %cst_87 [1, 2] : vector<1x1x512xf32> to vector<1xf32>
      %294 = vector.shape_cast %293 : vector<1xf32> to vector<1x1x1xf32>
      %295 = vector.extract %294[0, 0, 0] : f32 from vector<1x1x1xf32>
      %296 = arith.cmpf oge, %295, %49 : f32
      %297 = arith.select %296, %286, %285 : i32
      %c1024_i32 = arith.constant 1024 : i32
      %298 = arith.addi %297, %c1024_i32 : i32
      %299 = vector.broadcast %298 : i32 to vector<1x512xi32>
      %300 = arith.cmpi sge, %57, %299 : vector<1x512xi32>
      %cst_88 = arith.constant 1.000000e+00 : f32
      %cst_89 = arith.constant 0.000000e+00 : f32
      %301 = vector.broadcast %cst_88 : f32 to vector<1x512xf32>
      %302 = vector.broadcast %cst_89 : f32 to vector<1x512xf32>
      %303 = arith.select %300, %301, %302 : vector<1x512xi1>, vector<1x512xf32>
      %304 = vector.shape_cast %303 : vector<1x512xf32> to vector<1x1x512xf32>
      %cst_90 = arith.constant dense<0.000000e+00> : vector<1xf32>
      %305 = vector.multi_reduction <add>, %304, %cst_90 [1, 2] : vector<1x1x512xf32> to vector<1xf32>
      %306 = vector.shape_cast %305 : vector<1xf32> to vector<1x1x1xf32>
      %307 = vector.extract %306[0, 0, 0] : f32 from vector<1x1x1xf32>
      %308 = arith.cmpf oge, %307, %49 : f32
      %309 = arith.select %308, %298, %297 : i32
      %c512_i32 = arith.constant 512 : i32
      %310 = arith.addi %309, %c512_i32 : i32
      %311 = vector.broadcast %310 : i32 to vector<1x512xi32>
      %312 = arith.cmpi sge, %57, %311 : vector<1x512xi32>
      %cst_91 = arith.constant 1.000000e+00 : f32
      %cst_92 = arith.constant 0.000000e+00 : f32
      %313 = vector.broadcast %cst_91 : f32 to vector<1x512xf32>
      %314 = vector.broadcast %cst_92 : f32 to vector<1x512xf32>
      %315 = arith.select %312, %313, %314 : vector<1x512xi1>, vector<1x512xf32>
      %316 = vector.shape_cast %315 : vector<1x512xf32> to vector<1x1x512xf32>
      %cst_93 = arith.constant dense<0.000000e+00> : vector<1xf32>
      %317 = vector.multi_reduction <add>, %316, %cst_93 [1, 2] : vector<1x1x512xf32> to vector<1xf32>
      %318 = vector.shape_cast %317 : vector<1xf32> to vector<1x1x1xf32>
      %319 = vector.extract %318[0, 0, 0] : f32 from vector<1x1x1xf32>
      %320 = arith.cmpf oge, %319, %49 : f32
      %321 = arith.select %320, %310, %309 : i32
      %c256_i32 = arith.constant 256 : i32
      %322 = arith.addi %321, %c256_i32 : i32
      %323 = vector.broadcast %322 : i32 to vector<1x512xi32>
      %324 = arith.cmpi sge, %57, %323 : vector<1x512xi32>
      %cst_94 = arith.constant 1.000000e+00 : f32
      %cst_95 = arith.constant 0.000000e+00 : f32
      %325 = vector.broadcast %cst_94 : f32 to vector<1x512xf32>
      %326 = vector.broadcast %cst_95 : f32 to vector<1x512xf32>
      %327 = arith.select %324, %325, %326 : vector<1x512xi1>, vector<1x512xf32>
      %328 = vector.shape_cast %327 : vector<1x512xf32> to vector<1x1x512xf32>
      %cst_96 = arith.constant dense<0.000000e+00> : vector<1xf32>
      %329 = vector.multi_reduction <add>, %328, %cst_96 [1, 2] : vector<1x1x512xf32> to vector<1xf32>
      %330 = vector.shape_cast %329 : vector<1xf32> to vector<1x1x1xf32>
      %331 = vector.extract %330[0, 0, 0] : f32 from vector<1x1x1xf32>
      %332 = arith.cmpf oge, %331, %49 : f32
      %333 = arith.select %332, %322, %321 : i32
      %c128_i32 = arith.constant 128 : i32
      %334 = arith.addi %333, %c128_i32 : i32
      %335 = vector.broadcast %334 : i32 to vector<1x512xi32>
      %336 = arith.cmpi sge, %57, %335 : vector<1x512xi32>
      %cst_97 = arith.constant 1.000000e+00 : f32
      %cst_98 = arith.constant 0.000000e+00 : f32
      %337 = vector.broadcast %cst_97 : f32 to vector<1x512xf32>
      %338 = vector.broadcast %cst_98 : f32 to vector<1x512xf32>
      %339 = arith.select %336, %337, %338 : vector<1x512xi1>, vector<1x512xf32>
      %340 = vector.shape_cast %339 : vector<1x512xf32> to vector<1x1x512xf32>
      %cst_99 = arith.constant dense<0.000000e+00> : vector<1xf32>
      %341 = vector.multi_reduction <add>, %340, %cst_99 [1, 2] : vector<1x1x512xf32> to vector<1xf32>
      %342 = vector.shape_cast %341 : vector<1xf32> to vector<1x1x1xf32>
      %343 = vector.extract %342[0, 0, 0] : f32 from vector<1x1x1xf32>
      %344 = arith.cmpf oge, %343, %49 : f32
      %345 = arith.select %344, %334, %333 : i32
      %c64_i32 = arith.constant 64 : i32
      %346 = arith.addi %345, %c64_i32 : i32
      %347 = vector.broadcast %346 : i32 to vector<1x512xi32>
      %348 = arith.cmpi sge, %57, %347 : vector<1x512xi32>
      %cst_100 = arith.constant 1.000000e+00 : f32
      %cst_101 = arith.constant 0.000000e+00 : f32
      %349 = vector.broadcast %cst_100 : f32 to vector<1x512xf32>
      %350 = vector.broadcast %cst_101 : f32 to vector<1x512xf32>
      %351 = arith.select %348, %349, %350 : vector<1x512xi1>, vector<1x512xf32>
      %352 = vector.shape_cast %351 : vector<1x512xf32> to vector<1x1x512xf32>
      %cst_102 = arith.constant dense<0.000000e+00> : vector<1xf32>
      %353 = vector.multi_reduction <add>, %352, %cst_102 [1, 2] : vector<1x1x512xf32> to vector<1xf32>
      %354 = vector.shape_cast %353 : vector<1xf32> to vector<1x1x1xf32>
      %355 = vector.extract %354[0, 0, 0] : f32 from vector<1x1x1xf32>
      %356 = arith.cmpf oge, %355, %49 : f32
      %357 = arith.select %356, %346, %345 : i32
      %c32_i32 = arith.constant 32 : i32
      %358 = arith.addi %357, %c32_i32 : i32
      %359 = vector.broadcast %358 : i32 to vector<1x512xi32>
      %360 = arith.cmpi sge, %57, %359 : vector<1x512xi32>
      %cst_103 = arith.constant 1.000000e+00 : f32
      %cst_104 = arith.constant 0.000000e+00 : f32
      %361 = vector.broadcast %cst_103 : f32 to vector<1x512xf32>
      %362 = vector.broadcast %cst_104 : f32 to vector<1x512xf32>
      %363 = arith.select %360, %361, %362 : vector<1x512xi1>, vector<1x512xf32>
      %364 = vector.shape_cast %363 : vector<1x512xf32> to vector<1x1x512xf32>
      %cst_105 = arith.constant dense<0.000000e+00> : vector<1xf32>
      %365 = vector.multi_reduction <add>, %364, %cst_105 [1, 2] : vector<1x1x512xf32> to vector<1xf32>
      %366 = vector.shape_cast %365 : vector<1xf32> to vector<1x1x1xf32>
      %367 = vector.extract %366[0, 0, 0] : f32 from vector<1x1x1xf32>
      %368 = arith.cmpf oge, %367, %49 : f32
      %369 = arith.select %368, %358, %357 : i32
      %c16_i32 = arith.constant 16 : i32
      %370 = arith.addi %369, %c16_i32 : i32
      %371 = vector.broadcast %370 : i32 to vector<1x512xi32>
      %372 = arith.cmpi sge, %57, %371 : vector<1x512xi32>
      %cst_106 = arith.constant 1.000000e+00 : f32
      %cst_107 = arith.constant 0.000000e+00 : f32
      %373 = vector.broadcast %cst_106 : f32 to vector<1x512xf32>
      %374 = vector.broadcast %cst_107 : f32 to vector<1x512xf32>
      %375 = arith.select %372, %373, %374 : vector<1x512xi1>, vector<1x512xf32>
      %376 = vector.shape_cast %375 : vector<1x512xf32> to vector<1x1x512xf32>
      %cst_108 = arith.constant dense<0.000000e+00> : vector<1xf32>
      %377 = vector.multi_reduction <add>, %376, %cst_108 [1, 2] : vector<1x1x512xf32> to vector<1xf32>
      %378 = vector.shape_cast %377 : vector<1xf32> to vector<1x1x1xf32>
      %379 = vector.extract %378[0, 0, 0] : f32 from vector<1x1x1xf32>
      %380 = arith.cmpf oge, %379, %49 : f32
      %381 = arith.select %380, %370, %369 : i32
      %c8_i32 = arith.constant 8 : i32
      %382 = arith.addi %381, %c8_i32 : i32
      %383 = vector.broadcast %382 : i32 to vector<1x512xi32>
      %384 = arith.cmpi sge, %57, %383 : vector<1x512xi32>
      %cst_109 = arith.constant 1.000000e+00 : f32
      %cst_110 = arith.constant 0.000000e+00 : f32
      %385 = vector.broadcast %cst_109 : f32 to vector<1x512xf32>
      %386 = vector.broadcast %cst_110 : f32 to vector<1x512xf32>
      %387 = arith.select %384, %385, %386 : vector<1x512xi1>, vector<1x512xf32>
      %388 = vector.shape_cast %387 : vector<1x512xf32> to vector<1x1x512xf32>
      %cst_111 = arith.constant dense<0.000000e+00> : vector<1xf32>
      %389 = vector.multi_reduction <add>, %388, %cst_111 [1, 2] : vector<1x1x512xf32> to vector<1xf32>
      %390 = vector.shape_cast %389 : vector<1xf32> to vector<1x1x1xf32>
      %391 = vector.extract %390[0, 0, 0] : f32 from vector<1x1x1xf32>
      %392 = arith.cmpf oge, %391, %49 : f32
      %393 = arith.select %392, %382, %381 : i32
      %c4_i32 = arith.constant 4 : i32
      %394 = arith.addi %393, %c4_i32 : i32
      %395 = vector.broadcast %394 : i32 to vector<1x512xi32>
      %396 = arith.cmpi sge, %57, %395 : vector<1x512xi32>
      %cst_112 = arith.constant 1.000000e+00 : f32
      %cst_113 = arith.constant 0.000000e+00 : f32
      %397 = vector.broadcast %cst_112 : f32 to vector<1x512xf32>
      %398 = vector.broadcast %cst_113 : f32 to vector<1x512xf32>
      %399 = arith.select %396, %397, %398 : vector<1x512xi1>, vector<1x512xf32>
      %400 = vector.shape_cast %399 : vector<1x512xf32> to vector<1x1x512xf32>
      %cst_114 = arith.constant dense<0.000000e+00> : vector<1xf32>
      %401 = vector.multi_reduction <add>, %400, %cst_114 [1, 2] : vector<1x1x512xf32> to vector<1xf32>
      %402 = vector.shape_cast %401 : vector<1xf32> to vector<1x1x1xf32>
      %403 = vector.extract %402[0, 0, 0] : f32 from vector<1x1x1xf32>
      %404 = arith.cmpf oge, %403, %49 : f32
      %405 = arith.select %404, %394, %393 : i32
      %c2_i32 = arith.constant 2 : i32
      %406 = arith.addi %405, %c2_i32 : i32
      %407 = vector.broadcast %406 : i32 to vector<1x512xi32>
      %408 = arith.cmpi sge, %57, %407 : vector<1x512xi32>
      %cst_115 = arith.constant 1.000000e+00 : f32
      %cst_116 = arith.constant 0.000000e+00 : f32
      %409 = vector.broadcast %cst_115 : f32 to vector<1x512xf32>
      %410 = vector.broadcast %cst_116 : f32 to vector<1x512xf32>
      %411 = arith.select %408, %409, %410 : vector<1x512xi1>, vector<1x512xf32>
      %412 = vector.shape_cast %411 : vector<1x512xf32> to vector<1x1x512xf32>
      %cst_117 = arith.constant dense<0.000000e+00> : vector<1xf32>
      %413 = vector.multi_reduction <add>, %412, %cst_117 [1, 2] : vector<1x1x512xf32> to vector<1xf32>
      %414 = vector.shape_cast %413 : vector<1xf32> to vector<1x1x1xf32>
      %415 = vector.extract %414[0, 0, 0] : f32 from vector<1x1x1xf32>
      %416 = arith.cmpf oge, %415, %49 : f32
      %417 = arith.select %416, %406, %405 : i32
      %c1_i32 = arith.constant 1 : i32
      %418 = arith.addi %417, %c1_i32 : i32
      %419 = vector.broadcast %418 : i32 to vector<1x512xi32>
      %420 = arith.cmpi sge, %57, %419 : vector<1x512xi32>
      %cst_118 = arith.constant 1.000000e+00 : f32
      %cst_119 = arith.constant 0.000000e+00 : f32
      %421 = vector.broadcast %cst_118 : f32 to vector<1x512xf32>
      %422 = vector.broadcast %cst_119 : f32 to vector<1x512xf32>
      %423 = arith.select %420, %421, %422 : vector<1x512xi1>, vector<1x512xf32>
      %424 = vector.shape_cast %423 : vector<1x512xf32> to vector<1x1x512xf32>
      %cst_120 = arith.constant dense<0.000000e+00> : vector<1xf32>
      %425 = vector.multi_reduction <add>, %424, %cst_120 [1, 2] : vector<1x1x512xf32> to vector<1xf32>
      %426 = vector.shape_cast %425 : vector<1xf32> to vector<1x1x1xf32>
      %427 = vector.extract %426[0, 0, 0] : f32 from vector<1x1x1xf32>
      %428 = arith.cmpf oge, %427, %49 : f32
      %429 = arith.select %428, %418, %417 : i32
      %430 = vector.broadcast %429 : i32 to vector<1x512xi32>
      %431 = arith.cmpi sgt, %57, %430 : vector<1x512xi32>
      %cst_121 = arith.constant 1.000000e+00 : f32
      %cst_122 = arith.constant 0.000000e+00 : f32
      %432 = vector.broadcast %cst_121 : f32 to vector<1x512xf32>
      %433 = vector.broadcast %cst_122 : f32 to vector<1x512xf32>
      %434 = arith.select %431, %432, %433 : vector<1x512xi1>, vector<1x512xf32>
      %435 = vector.shape_cast %434 : vector<1x512xf32> to vector<1x1x512xf32>
      %cst_123 = arith.constant dense<0.000000e+00> : vector<1xf32>
      %436 = vector.multi_reduction <add>, %435, %cst_123 [1, 2] : vector<1x1x512xf32> to vector<1xf32>
      %437 = vector.shape_cast %436 : vector<1xf32> to vector<1x1x1xf32>
      %438 = vector.extract %437[0, 0, 0] : f32 from vector<1x1x1xf32>
      %439 = arith.subf %49, %438 : f32
      %440 = vector.broadcast %429 : i32 to vector<1x512xi32>
      %441 = arith.cmpi eq, %57, %440 : vector<1x512xi32>
      %cst_124 = arith.constant 0xFF800000 : f32
      %442 = vector.broadcast %cst_124 : f32 to vector<1x512xf32>
      %443 = arith.select %441, %1, %442 : vector<1x512xi1>, vector<1x512xf32>
      %444 = vector.shape_cast %443 : vector<1x512xf32> to vector<1x1x512xf32>
      %cst_125 = arith.constant dense<0xFF800000> : vector<1xf32>
      %445 = vector.multi_reduction <maximumf>, %444, %cst_125 [1, 2] : vector<1x1x512xf32> to vector<1xf32>
      %446 = vector.shape_cast %445 : vector<1xf32> to vector<1x1x1xf32>
      %447 = vector.extract %446[0, 0, 0] : f32 from vector<1x1x1xf32>
      %448 = math.exp %447 : f32
      %cst_126 = arith.constant 0xFF800000 : f32
      %449 = vector.broadcast %cst_126 : f32 to vector<1x512xf32>
      %450 = arith.select %7, %8, %449 : vector<1x512xi1>, vector<1x512xf32>
      %451 = vector.shape_cast %450 : vector<1x512xf32> to vector<1x1x512xf32>
      %cst_127 = arith.constant dense<0xFF800000> : vector<1xf32>
      %452 = vector.multi_reduction <maximumf>, %451, %cst_127 [1, 2] : vector<1x1x512xf32> to vector<1xf32>
      %453 = vector.shape_cast %452 : vector<1xf32> to vector<1x1x1xf32>
      %454 = vector.extract %453[0, 0, 0] : f32 from vector<1x1x1xf32>
      %455 = vector.broadcast %454 : f32 to vector<1x512xf32>
      %456 = arith.subf %8, %455 : vector<1x512xf32>
      %457 = math.exp %456 : vector<1x512xf32>
      %cst_128 = arith.constant 0.000000e+00 : f32
      %458 = vector.broadcast %cst_128 : f32 to vector<1x512xf32>
      %459 = arith.select %431, %457, %458 : vector<1x512xi1>, vector<1x512xf32>
      %460 = arith.subf %448, %454 : f32
      %461 = math.exp %460 : f32
      %462 = vector.shape_cast %459 : vector<1x512xf32> to vector<1x1x512xf32>
      %cst_129 = arith.constant dense<0.000000e+00> : vector<1xf32>
      %463 = vector.multi_reduction <add>, %462, %cst_129 [1, 2] : vector<1x1x512xf32> to vector<1xf32>
      %464 = vector.shape_cast %463 : vector<1xf32> to vector<1x1x1xf32>
      %465 = vector.extract %464[0, 0, 0] : f32 from vector<1x1x1xf32>
      %466 = arith.mulf %439, %461 : f32
      %467 = arith.addf %465, %466 : f32
      %cst_130 = arith.constant 0.000000e+00 : f32
      %468 = vector.broadcast %cst_130 : f32 to vector<1x512xf32>
      %469 = arith.select %431, %8, %468 : vector<1x512xi1>, vector<1x512xf32>
      %470 = arith.mulf %469, %459 : vector<1x512xf32>
      %471 = vector.shape_cast %470 : vector<1x512xf32> to vector<1x1x512xf32>
      %cst_131 = arith.constant dense<0.000000e+00> : vector<1xf32>
      %472 = vector.multi_reduction <add>, %471, %cst_131 [1, 2] : vector<1x1x512xf32> to vector<1xf32>
      %473 = vector.shape_cast %472 : vector<1xf32> to vector<1x1x1xf32>
      %474 = vector.extract %473[0, 0, 0] : f32 from vector<1x1x1xf32>
      %475 = arith.mulf %439, %448 : f32
      %476 = arith.mulf %475, %461 : f32
      %477 = arith.addf %474, %476 : f32
      %478 = arith.divf %477, %467 : f32
      %cst_132 = arith.constant 0.000000e+00 : f32
      %479 = arith.cmpf ogt, %15, %cst_132 : f32
      %cst_133 = arith.constant 1.000000e+00 : f32
      %480 = arith.select %479, %30, %cst_133 : f32
      %481 = arith.subf %478, %480 : f32
      %cst_134 = arith.constant 5.000000e-01 : f32
      %482 = arith.addf %481, %cst_134 : f32
      %cst_135 = arith.constant 4.000000e+00 : f32
      %483 = arith.mulf %cst_135, %482 : f32
      %cst_136 = arith.constant 0.000000e+00 : f32
      %484 = arith.maximumf %483, %cst_136 : f32
      %485 = math.absf %483 : f32
      %cst_137 = arith.constant 0.000000e+00 : f32
      %486 = arith.subf %cst_137, %485 : f32
      %487 = math.exp %486 : f32
      %cst_138 = arith.constant 1.000000e+00 : f32
      %488 = arith.addf %cst_138, %487 : f32
      %489 = math.log %488 : f32
      %490 = arith.addf %484, %489 : f32
      %cst_139 = arith.constant 4.000000e+00 : f32
      %491 = arith.divf %490, %cst_139 : f32
      %492 = tpu.iota {dimensions = array<i32: 1>} : vector<1x128xi32>
      %c0_i32_140 = arith.constant 0 : i32
      %493 = vector.broadcast %c0_i32_140 : i32 to vector<1x128xi32>
      %494 = arith.cmpi eq, %492, %493 : vector<1x128xi32>
      %c1_i32_141 = arith.constant 1 : i32
      %495 = vector.broadcast %c1_i32_141 : i32 to vector<1x128xi32>
      %496 = arith.cmpi eq, %492, %495 : vector<1x128xi32>
      %cst_142 = arith.constant 1.000000e+00 : f32
      %cst_143 = arith.constant 0.000000e+00 : f32
      %497 = vector.broadcast %cst_142 : f32 to vector<1x128xf32>
      %498 = vector.broadcast %cst_143 : f32 to vector<1x128xf32>
      %499 = arith.select %496, %497, %498 : vector<1x128xi1>, vector<1x128xf32>
      %500 = vector.broadcast %491 : f32 to vector<1x128xf32>
      %501 = arith.select %494, %500, %499 : vector<1x128xi1>, vector<1x128xf32>
      %c0_144 = arith.constant 0 : index
      %c0_145 = arith.constant 0 : index
      %c0_146 = arith.constant 0 : index
      %502 = vector.load %arg2[%c0_144, %c0_145, %c0_146] : memref<1x1x128xf32, #tpu.memory_space<vmem>>, vector<1x1x128xf32>
      %503 = vector.shape_cast %502 : vector<1x1x128xf32> to vector<1x128xf32>
      %504 = vector.shape_cast %501 : vector<1x128xf32> to vector<1x1x128xf32>
      tpu.vector_store %arg2[%c0_144, %c0_145, %c0_146], %504 {strides = array<i32>} : memref<1x1x128xf32, #tpu.memory_space<vmem>>, vector<1x1x128xf32>,
    } else {
    }
    return
  }
  func.func @transform_0(%arg0: i32) -> (i32, i32, i32) {
    %c0_i32 = arith.constant 0 : i32
    %c0_i32_0 = arith.constant 0 : i32
    %c0_i32_1 = arith.constant 0 : i32
    return %arg0, %c0_i32, %c0_i32_0 : i32, i32, i32
  }
  func.func @transform_1(%arg0: i32) -> (i32, i32, i32) {
    %c0_i32 = arith.constant 0 : i32
    %c0_i32_0 = arith.constant 0 : i32
    %c0_i32_1 = arith.constant 0 : i32
    return %arg0, %c0_i32, %c0_i32_0 : i32, i32, i32
  }
}

</mosaic_0001>

<llo_original>
// kernel: rank_cls_loss.1
$region0: #{rank_cls_loss.1}
  #allocation0 [shape = 'u32[]', space=smem, size = 0x4, offset = 0x4, fixed_abs, tag = 'smem constant byte address 0x4 - core index']
  #allocation1 [shape = 'u32[144,128]{1,0:T(1,128)}', space=vmem, size = 0x12000, scoped, tag = 'internal scratch']
  %s0 = inlined_call_operand.vmem [shape: f32[2,1,1024], index: 0, kind: input, shape index: {}]
  %s1 = inlined_call_operand.vmem [shape: f32[2,1,128], index: 1, kind: output, shape index: {}]
  %s2 = sld [smem:[#allocation0]]
  $region41: #{rank_cls_loss.1} parent=0
    _
  %s4 = ssub.s32 1, %s2
  %s5 = scalar_select 0, %s4, %s2
  loop: start=0, step=1, limit=4
  $region2: #{rank_cls_loss.1} parent=0 // loop_pre_header
    _
  $region3: #{rank_cls_loss.1} parent=0 // loop_header
    %s7 = sphi 0, %s11
    %p8 = scmp.ge.s32.totalorder %s7, 4
    %s17 = sphi 0, %s19
    %s20 = sphi 0, %s17
    %s21 = sphi 0, %s20
    %s37 = sphi 0, %s21
    %s43 = sphi 0, %s45
    %s46 = sphi 0, %s43
    %s47 = sphi 0, %s46
    %s63 = sphi 0, %s47
  $region4: #{rank_cls_loss.1} parent=0 // loop_header_branch
    %10 = sbr.rel (%p8) target = $region8
  $region5: #{rank_cls_loss.1} parent=0 // loop_body
    %s12 = ssub.s32 %s7, 1
    %s13 = ssub.s32 %s7, 2
    %s14 = sadd.s32 %s7, 1
    %s15 = ssub.s32 %s7, %s14
    %p16 = scmp.eq.s32.totalorder %s15, 0
    %s18 = sadd.s32 %s17, 1
    %s19 = scalar_select %p16, %s17, %s18
    %p22 = pneg %p16
    %p23 = scmp.eq.s32.totalorder %s7, 1
    %p24 = por %p22, %p23
    %p25 = scmp.ne.s32.totalorder %s17, %s20
    %p26 = scmp.eq.s32.totalorder %s7, 0
    %p27 = por %p25, %p26
    %p28 = scmp.ne.s32.totalorder %s17, %s20
    %p29 = scmp.eq.s32.totalorder %s12, 1
    %p30 = por %p28, %p29
    %p31 = scmp.ne.s32.totalorder %s20, %s21
    %p32 = scmp.eq.s32.totalorder %s12, 0
    %p33 = por %p31, %p32
    %p34 = scmp.ne.s32.totalorder %s20, %s21
    %p35 = scmp.eq.s32.totalorder %s13, 1
    %p36 = por %p34, %p35
    %p38 = scmp.ne.s32.totalorder %s21, %s37
    %p39 = scmp.eq.s32.totalorder %s13, 0
    %p40 = por %p38, %p39
    %s41 = ssub.s32 %s7, %s14
    %p42 = scmp.eq.s32.totalorder %s41, 0
    %s44 = sadd.s32 %s43, 1
    %s45 = scalar_select %p42, %s43, %s44
    %p48 = pneg %p42
    %p49 = scmp.eq.s32.totalorder %s7, 1
    %p50 = por %p48, %p49
    %p51 = scmp.ne.s32.totalorder %s43, %s46
    %p52 = scmp.eq.s32.totalorder %s7, 0
    %p53 = por %p51, %p52
    %p54 = scmp.ne.s32.totalorder %s43, %s46
    %p55 = scmp.eq.s32.totalorder %s12, 1
    %p56 = por %p54, %p55
    %p57 = scmp.ne.s32.totalorder %s46, %s47
    %p58 = scmp.eq.s32.totalorder %s12, 0
    %p59 = por %p57, %p58
    %p60 = scmp.ne.s32.totalorder %s46, %s47
    %p61 = scmp.eq.s32.totalorder %s13, 1
    %p62 = por %p60, %p61
    %p64 = scmp.ne.s32.totalorder %s47, %s63
    %p65 = scmp.eq.s32.totalorder %s13, 0
    %p66 = por %p64, %p65
    %p67 = scmp.le.s32.totalorder 1, %s7
    %p68 = scmp.lt.s32.totalorder %s7, 3
    %p69 = pnand %p67, %p68
    %p70 = pneg %p69
    // Predicated region
    $region9: #{rank_cls_loss.1} parent=5 // pred_check
      _
    $region10: #{rank_cls_loss.1} parent=5 // pred_check_branch
      %72 = sbr.rel (%p69) target = $region12
    $region11: #{rank_cls_loss.1} parent=5 // pred_region
      %s73 = ssub.s32 %s7, 1
    $region12: #{rank_cls_loss.1} parent=5 // pred_fallthru
      _
    %p74 = scmp.lt.s32.totalorder %s7, 2
    // Predicated region
    $region13: #{rank_cls_loss.1} parent=5 // pred_check
      %p75 = pneg %p74
    $region14: #{rank_cls_loss.1} parent=5 // pred_check_branch
      %77 = sbr.rel (%p75) target = $region16
    $region15: #{rank_cls_loss.1} parent=5 // pred_region
      // Predicated region
      $region17: #{rank_cls_loss.1} parent=15 // pred_check
        %p78 = pneg %p27
      $region18: #{rank_cls_loss.1} parent=15 // pred_check_branch
        %80 = sbr.rel (%p78) target = $region20
      $region19: #{rank_cls_loss.1} parent=15 // pred_region
        %p81 = scmp.lt.s32.totalorder %s7, 1
        %s82 = scalar_select %p81, %s7, 1
        %s83 = smul.addr %s82, 8
        %s84 = scalar_lea.vmem %s0, %s83
      $region20: #{rank_cls_loss.1} parent=15 // pred_fallthru
        _
    $region16: #{rank_cls_loss.1} parent=5 // pred_fallthru
      _
    %p85 = scmp.le.s32.totalorder 1, %s7
    %p86 = scmp.lt.s32.totalorder %s7, 3
    %p87 = pnand %p85, %p86
    %p88 = pneg %p87
    // Predicated region
    $region21: #{rank_cls_loss.1} parent=5 // pred_check
      _
    $region22: #{rank_cls_loss.1} parent=5 // pred_check_branch
      %90 = sbr.rel (%p87) target = $region24
    $region23: #{rank_cls_loss.1} parent=5 // pred_region
      %s91 = ssub.s32 %s7, 1
      %p92 = scmp.lt.s32.totalorder %s12, 1
      %s93 = scalar_select %p92, %s12, 1
      %s94 = smul.addr %s93, 8
      %s95 = scalar_lea.vmem %s0, %s94
      %p96 = pneg %p33
      %p97 = pneg %p30
      %p98 = pneg %p59
      %p99 = pneg %p56
      %p100 = scmp.lt.s32.totalorder %s12, 1
      %s101 = scalar_select %p100, %s12, 1
      %s102 = scalar_lea.vmem %s1, %s101
      %p103 = scmp.lt.s32.totalorder %s12, 1
      %s104 = scalar_select %p103, %s12, 1
      %s105 = smul.addr %s104, 8
      %s106 = scalar_lea.vmem %s0, %s105
      %p107 = scmp.lt.s32.totalorder %s12, 1
      %s108 = scalar_select %p107, %s12, 1
      %s109 = scalar_lea.vmem %s1, %s108
      %v110 = vld [vmem:[%s106] sm:$0xf]
      %v111 = vld [vmem:[%s106 + $0x4] sm:$0xf]
      %vm112 = vcmp.eq.f32.partialorder %v111, 1.0
      %vm113 = vcmp.eq.f32.partialorder %v111, 0.0
      %v114 = vmul.f32 %v110, 1.442695
      %v115 = vpow.pop %v114
      %v116 = vsel %vm112, 1.0, 0.0
      %v118 = vlaneseq
      %v119 = vshrl.u32 %v118, 7
      %v120 = vsub.s32 0, %v119
      %v121 = vrot.slane %v116, %v120
      %v122 = vlaneseq
      %v123 = vshrl.u32 %v122, 7
      %v124 = vsub.s32 1, %v123
      %v125 = vrot.slane %v116, %v124
      %v126 = vlaneseq
      %v127 = vshrl.u32 %v126, 7
      %v128 = vsub.s32 2, %v127
      %v129 = vrot.slane %v116, %v128
      %v130 = vlaneseq
      %v131 = vshrl.u32 %v130, 7
      %v132 = vsub.s32 3, %v131
      %v133 = vrot.slane %v116, %v132
      %vm138 = vcmask 1040384
      %v139 = vsel %vm138, %v121, 0.0
      %v140 = vsel %vm138, %v125, 0.0
      %v141 = vadd.f32 %v139, %v140
      %v142 = vsel %vm138, %v129, 0.0
      %v143 = vadd.f32 %v141, %v142
      %v144 = vsel %vm138, %v133, 0.0
      %v145 = vadd.f32 %v143, %v144
      %146 = vadd.xlane.f32.xlu0 %v145
      %v147 = vpop.xlane.xlu0 %146
      %v148 = vrot.slane %v147, 4
      %v149 = vadd.f32 %v147, %v148
      %v150 = vrot.slane %v149, 2
      %v151 = vadd.f32 %v149, %v150
      %v152 = vrot.slane %v151, 1
      %v153 = vadd.f32 %v151, %v152
      %s154 = vtos %v153
      %v155 = vsel %vm113, 1.0, 0.0
      %v157 = vlaneseq
      %v158 = vshrl.u32 %v157, 7
      %v159 = vsub.s32 0, %v158
      %v160 = vrot.slane %v155, %v159
      %v161 = vlaneseq
      %v162 = vshrl.u32 %v161, 7
      %v163 = vsub.s32 1, %v162
      %v164 = vrot.slane %v155, %v163
      %v165 = vlaneseq
      %v166 = vshrl.u32 %v165, 7
      %v167 = vsub.s32 2, %v166
      %v168 = vrot.slane %v155, %v167
      %v169 = vlaneseq
      %v170 = vshrl.u32 %v169, 7
      %v171 = vsub.s32 3, %v170
      %v172 = vrot.slane %v155, %v171
      %v177 = vsel %vm138, %v160, 0.0
      %v178 = vsel %vm138, %v164, 0.0
      %v179 = vadd.f32 %v177, %v178
      %v180 = vsel %vm138, %v168, 0.0
      %v181 = vadd.f32 %v179, %v180
      %v182 = vsel %vm138, %v172, 0.0
      %v183 = vadd.f32 %v181, %v182
      %184 = vadd.xlane.f32.xlu0 %v183
      %v185 = vpop.xlane.xlu0 %184
      %v186 = vrot.slane %v185, 4
      %v187 = vadd.f32 %v185, %v186
      %v188 = vrot.slane %v187, 2
      %v189 = vadd.f32 %v187, %v188
      %v190 = vrot.slane %v189, 1
      %v191 = vadd.f32 %v189, %v190
      %s192 = vtos %v191
      %v193 = vsel %vm112, %v115, 0.0
      %v195 = vlaneseq
      %v196 = vshrl.u32 %v195, 7
      %v197 = vsub.s32 0, %v196
      %v198 = vrot.slane %v193, %v197
      %v199 = vlaneseq
      %v200 = vshrl.u32 %v199, 7
      %v201 = vsub.s32 1, %v200
      %v202 = vrot.slane %v193, %v201
      %v203 = vlaneseq
      %v204 = vshrl.u32 %v203, 7
      %v205 = vsub.s32 2, %v204
      %v206 = vrot.slane %v193, %v205
      %v207 = vlaneseq
      %v208 = vshrl.u32 %v207, 7
      %v209 = vsub.s32 3, %v208
      %v210 = vrot.slane %v193, %v209
      %v215 = vsel %vm138, %v198, 0.0
      %v216 = vsel %vm138, %v202, 0.0
      %v217 = vadd.f32 %v215, %v216
      %v218 = vsel %vm138, %v206, 0.0
      %v219 = vadd.f32 %v217, %v218
      %v220 = vsel %vm138, %v210, 0.0
      %v221 = vadd.f32 %v219, %v220
      %222 = vadd.xlane.f32.xlu0 %v221
      %v223 = vpop.xlane.xlu0 %222
      %v224 = vrot.slane %v223, 4
      %v225 = vadd.f32 %v223, %v224
      %v226 = vrot.slane %v225, 2
      %v227 = vadd.f32 %v225, %v226
      %v228 = vrot.slane %v227, 1
      %v229 = vadd.f32 %v227, %v228
      %s230 = vtos %v229
      %s231 = smax.f32 %s154, 1.0
      %v232 = vstv %s231
      %v233 = vrcp.pop %v232
      %s234 = vtos %v233
      %s235 = smul.f32 %s230, %s234
      %vm236 = vcmp.gt.f32.partialorder %v115, 0.5
      %vm237 = vmand %vm113, %vm236
      %v238 = vsel %vm237, 1.0, 0.0
      %v240 = vlaneseq
      %v241 = vshrl.u32 %v240, 7
      %v242 = vsub.s32 0, %v241
      %v243 = vrot.slane %v238, %v242
      %v244 = vlaneseq
      %v245 = vshrl.u32 %v244, 7
      %v246 = vsub.s32 1, %v245
      %v247 = vrot.slane %v238, %v246
      %v248 = vlaneseq
      %v249 = vshrl.u32 %v248, 7
      %v250 = vsub.s32 2, %v249
      %v251 = vrot.slane %v238, %v250
      %v252 = vlaneseq
      %v253 = vshrl.u32 %v252, 7
      %v254 = vsub.s32 3, %v253
      %v255 = vrot.slane %v238, %v254
      %v260 = vsel %vm138, %v243, 0.0
      %v261 = vsel %vm138, %v247, 0.0
      %v262 = vadd.f32 %v260, %v261
      %v263 = vsel %vm138, %v251, 0.0
      %v264 = vadd.f32 %v262, %v263
      %v265 = vsel %vm138, %v255, 0.0
      %v266 = vadd.f32 %v264, %v265
      %267 = vadd.xlane.f32.xlu0 %v266
      %v268 = vpop.xlane.xlu0 %267
      %v269 = vrot.slane %v268, 4
      %v270 = vadd.f32 %v268, %v269
      %v271 = vrot.slane %v270, 2
      %v272 = vadd.f32 %v270, %v271
      %v273 = vrot.slane %v272, 1
      %v274 = vadd.f32 %v272, %v273
      %s275 = vtos %v274
      %p276 = scmp.gt.f32.partialorder %s275, 0.0
      %277 = vst [vmem:[%s109] sm:$0x1] 0.0
      // Predicated region
      $region25: #{rank_cls_loss.1} parent=23 // pred_check
        %p278 = pneg %p276
      $region26: #{rank_cls_loss.1} parent=23 // pred_check_branch
        %280 = sbr.rel (%p278) target = $region28
      $region27: #{rank_cls_loss.1} parent=23 // pred_region
        %p281 = scmp.gt.f32.partialorder %s154, 0.0
        %s282 = smax.f32 %s275, 8.0
        %s283 = scalar_select %p281, %s154, %s282
        %s284 = smin.f32 %s283, %s192
        %v286 = vlaneseq
        %v287 = vshrl.u32 %v286, 7
        %v288 = vsub.s32 0, %v287
        %v289 = vrot.slane %v110, %v288
        %v290 = vlaneseq
        %v291 = vshrl.u32 %v290, 7
        %v292 = vsub.s32 1, %v291
        %v293 = vrot.slane %v110, %v292
        %v294 = vlaneseq
        %v295 = vshrl.u32 %v294, 7
        %v296 = vsub.s32 2, %v295
        %v297 = vrot.slane %v110, %v296
        %v298 = vlaneseq
        %v299 = vshrl.u32 %v298, 7
        %v300 = vsub.s32 3, %v299
        %v301 = vrot.slane %v110, %v300
        %vm302 = vcmp.lt.s32.totalorder %v289, 0
        %vm303 = vcmp.lt.s32.totalorder %v293, 0
        %vm304 = vcmp.lt.s32.totalorder %v297, 0
        %vm305 = vcmp.lt.s32.totalorder %v301, 0
        %v306 = vxor.u32 %v289, 2147483647
        %v307 = vxor.u32 %v293, 2147483647
        %v308 = vxor.u32 %v297, 2147483647
        %v309 = vxor.u32 %v301, 2147483647
        %v310 = vsel %vm302, %v306, %v289
        %v311 = vsel %vm303, %v307, %v293
        %v312 = vsel %vm304, %v308, %v297
        %v313 = vsel %vm305, %v309, %v301
        %v314 = vcombine.low %v310, %v311
        %v315 = vcombine.low %v312, %v313
        %v317 = vunpack.c.l.s4 1966171168
        %v318 = vunpack.c.0.s8 %v317
        %v319 = vlaneseq
        %v320 = vshrl.u32 %v319, 7
        %v321 = vsub.s32 %v318, %v320
        %v322 = vrot.slane %v314, %v321
        %v324 = vunpack.c.l.s4 1966171168
        %v325 = vunpack.c.0.s8 %v324
        %v326 = vlaneseq
        %v327 = vshrl.u32 %v326, 7
        %v328 = vsub.s32 %v325, %v327
        %v329 = vrot.slane %v315, %v328
        %v330 = vcombine.low %v322, %v329
        %v332 = vunpack.c.l.s4 1966171168
        %v333 = vunpack.c.0.s8 %v332
        %v334 = vlaneseq
        %v335 = vshrl.u32 %v334, 7
        %v336 = vsub.s32 %v333, %v335
        %v337 = vrot.slane %v330, %v336
        %v338 = vsel %vm113, %v337, 2147483648
        %vm339 = vcmp.ge.s32.totalorder %v338, 3221225472
        %v340 = vsel %vm339, 1.0, 0.0
        %v342 = vlaneseq
        %v343 = vshrl.u32 %v342, 7
        %v344 = vsub.s32 0, %v343
        %v345 = vrot.slane %v340, %v344
        %v346 = vlaneseq
        %v347 = vshrl.u32 %v346, 7
        %v348 = vsub.s32 1, %v347
        %v349 = vrot.slane %v340, %v348
        %v350 = vlaneseq
        %v351 = vshrl.u32 %v350, 7
        %v352 = vsub.s32 2, %v351
        %v353 = vrot.slane %v340, %v352
        %v354 = vlaneseq
        %v355 = vshrl.u32 %v354, 7
        %v356 = vsub.s32 3, %v355
        %v357 = vrot.slane %v340, %v356
        %v362 = vsel %vm138, %v345, 0.0
        %v363 = vsel %vm138, %v349, 0.0
        %v364 = vadd.f32 %v362, %v363
        %v365 = vsel %vm138, %v353, 0.0
        %v366 = vadd.f32 %v364, %v365
        %v367 = vsel %vm138, %v357, 0.0
        %v368 = vadd.f32 %v366, %v367
        %369 = vadd.xlane.f32.xlu0 %v368
        %v370 = vpop.xlane.xlu0 %369
        %v371 = vrot.slane %v370, 4
        %v372 = vadd.f32 %v370, %v371
        %v373 = vrot.slane %v372, 2
        %v374 = vadd.f32 %v372, %v373
        %v375 = vrot.slane %v374, 1
        %v376 = vadd.f32 %v374, %v375
        %s377 = vtos %v376
        %p378 = scmp.ge.f32.partialorder %s377, %s284
        %s379 = scalar_select %p378, 3221225472, 2147483648
        %s380 = sadd.s32 %s379, 536870912
        %v381 = vstv %s380
        %vm382 = vcmp.ge.s32.totalorder %v338, %v381
        %v383 = vsel %vm382, 1.0, 0.0
        %v385 = vlaneseq
        %v386 = vshrl.u32 %v385, 7
        %v387 = vsub.s32 0, %v386
        %v388 = vrot.slane %v383, %v387
        %v389 = vlaneseq
        %v390 = vshrl.u32 %v389, 7
        %v391 = vsub.s32 1, %v390
        %v392 = vrot.slane %v383, %v391
        %v393 = vlaneseq
        %v394 = vshrl.u32 %v393, 7
        %v395 = vsub.s32 2, %v394
        %v396 = vrot.slane %v383, %v395
        %v397 = vlaneseq
        %v398 = vshrl.u32 %v397, 7
        %v399 = vsub.s32 3, %v398
        %v400 = vrot.slane %v383, %v399
        %v405 = vsel %vm138, %v388, 0.0
        %v406 = vsel %vm138, %v392, 0.0
        %v407 = vadd.f32 %v405, %v406
        %v408 = vsel %vm138, %v396, 0.0
        %v409 = vadd.f32 %v407, %v408
        %v410 = vsel %vm138, %v400, 0.0
        %v411 = vadd.f32 %v409, %v410
        %412 = vadd.xlane.f32.xlu0 %v411
        %v413 = vpop.xlane.xlu0 %412
        %v414 = vrot.slane %v413, 4
        %v415 = vadd.f32 %v413, %v414
        %v416 = vrot.slane %v415, 2
        %v417 = vadd.f32 %v415, %v416
        %v418 = vrot.slane %v417, 1
        %v419 = vadd.f32 %v417, %v418
        %s420 = vtos %v419
        %p421 = scmp.ge.f32.partialorder %s420, %s284
        %s422 = scalar_select %p421, %s380, %s379
        %s423 = sadd.s32 %s422, 268435456
        %v424 = vstv %s423
        %vm425 = vcmp.ge.s32.totalorder %v338, %v424
        %v426 = vsel %vm425, 1.0, 0.0
        %v428 = vlaneseq
        %v429 = vshrl.u32 %v428, 7
        %v430 = vsub.s32 0, %v429
        %v431 = vrot.slane %v426, %v430
        %v432 = vlaneseq
        %v433 = vshrl.u32 %v432, 7
        %v434 = vsub.s32 1, %v433
        %v435 = vrot.slane %v426, %v434
        %v436 = vlaneseq
        %v437 = vshrl.u32 %v436, 7
        %v438 = vsub.s32 2, %v437
        %v439 = vrot.slane %v426, %v438
        %v440 = vlaneseq
        %v441 = vshrl.u32 %v440, 7
        %v442 = vsub.s32 3, %v441
        %v443 = vrot.slane %v426, %v442
        %v448 = vsel %vm138, %v431, 0.0
        %v449 = vsel %vm138, %v435, 0.0
        %v450 = vadd.f32 %v448, %v449
        %v451 = vsel %vm138, %v439, 0.0
        %v452 = vadd.f32 %v450, %v451
        %v453 = vsel %vm138, %v443, 0.0
        %v454 = vadd.f32 %v452, %v453
        %455 = vadd.xlane.f32.xlu0 %v454
        %v456 = vpop.xlane.xlu0 %455
        %v457 = vrot.slane %v456, 4
        %v458 = vadd.f32 %v456, %v457
        %v459 = vrot.slane %v458, 2
        %v460 = vadd.f32 %v458, %v459
        %v461 = vrot.slane %v460, 1
        %v462 = vadd.f32 %v460, %v461
        %s463 = vtos %v462
        %p464 = scmp.ge.f32.partialorder %s463, %s284
        %s465 = scalar_select %p464, %s423, %s422
        %s466 = sadd.s32 %s465, 134217728
        %v467 = vstv %s466
        %vm468 = vcmp.ge.s32.totalorder %v338, %v467
        %v469 = vsel %vm468, 1.0, 0.0
        %v471 = vlaneseq
        %v472 = vshrl.u32 %v471, 7
        %v473 = vsub.s32 0, %v472
        %v474 = vrot.slane %v469, %v473
        %v475 = vlaneseq
        %v476 = vshrl.u32 %v475, 7
        %v477 = vsub.s32 1, %v476
        %v478 = vrot.slane %v469, %v477
        %v479 = vlaneseq
        %v480 = vshrl.u32 %v479, 7
        %v481 = vsub.s32 2, %v480
        %v482 = vrot.slane %v469, %v481
        %v483 = vlaneseq
        %v484 = vshrl.u32 %v483, 7
        %v485 = vsub.s32 3, %v484
        %v486 = vrot.slane %v469, %v485
        %v491 = vsel %vm138, %v474, 0.0
        %v492 = vsel %vm138, %v478, 0.0
        %v493 = vadd.f32 %v491, %v492
        %v494 = vsel %vm138, %v482, 0.0
        %v495 = vadd.f32 %v493, %v494
        %v496 = vsel %vm138, %v486, 0.0
        %v497 = vadd.f32 %v495, %v496
        %498 = vadd.xlane.f32.xlu0 %v497
        %v499 = vpop.xlane.xlu0 %498
        %v500 = vrot.slane %v499, 4
        %v501 = vadd.f32 %v499, %v500
        %v502 = vrot.slane %v501, 2
        %v503 = vadd.f32 %v501, %v502
        %v504 = vrot.slane %v503, 1
        %v505 = vadd.f32 %v503, %v504
        %s506 = vtos %v505
        %p507 = scmp.ge.f32.partialorder %s506, %s284
        %s508 = scalar_select %p507, %s466, %s465
        %s509 = sadd.s32 %s508, 67108864
        %v510 = vstv %s509
        %vm511 = vcmp.ge.s32.totalorder %v338, %v510
        %v512 = vsel %vm511, 1.0, 0.0
        %v514 = vlaneseq
        %v515 = vshrl.u32 %v514, 7
        %v516 = vsub.s32 0, %v515
        %v517 = vrot.slane %v512, %v516
        %v518 = vlaneseq
        %v519 = vshrl.u32 %v518, 7
        %v520 = vsub.s32 1, %v519
        %v521 = vrot.slane %v512, %v520
        %v522 = vlaneseq
        %v523 = vshrl.u32 %v522, 7
        %v524 = vsub.s32 2, %v523
        %v525 = vrot.slane %v512, %v524
        %v526 = vlaneseq
        %v527 = vshrl.u32 %v526, 7
        %v528 = vsub.s32 3, %v527
        %v529 = vrot.slane %v512, %v528
        %v534 = vsel %vm138, %v517, 0.0
        %v535 = vsel %vm138, %v521, 0.0
        %v536 = vadd.f32 %v534, %v535
        %v537 = vsel %vm138, %v525, 0.0
        %v538 = vadd.f32 %v536, %v537
        %v539 = vsel %vm138, %v529, 0.0
        %v540 = vadd.f32 %v538, %v539
        %541 = vadd.xlane.f32.xlu0 %v540
        %v542 = vpop.xlane.xlu0 %541
        %v543 = vrot.slane %v542, 4
        %v544 = vadd.f32 %v542, %v543
        %v545 = vrot.slane %v544, 2
        %v546 = vadd.f32 %v544, %v545
        %v547 = vrot.slane %v546, 1
        %v548 = vadd.f32 %v546, %v547
        %s549 = vtos %v548
        %p550 = scmp.ge.f32.partialorder %s549, %s284
        %s551 = scalar_select %p550, %s509, %s508
        %s552 = sadd.s32 %s551, 33554432
        %v553 = vstv %s552
        %vm554 = vcmp.ge.s32.totalorder %v338, %v553
        %v555 = vsel %vm554, 1.0, 0.0
        %v557 = vlaneseq
        %v558 = vshrl.u32 %v557, 7
        %v559 = vsub.s32 0, %v558
        %v560 = vrot.slane %v555, %v559
        %v561 = vlaneseq
        %v562 = vshrl.u32 %v561, 7
        %v563 = vsub.s32 1, %v562
        %v564 = vrot.slane %v555, %v563
        %v565 = vlaneseq
        %v566 = vshrl.u32 %v565, 7
        %v567 = vsub.s32 2, %v566
        %v568 = vrot.slane %v555, %v567
        %v569 = vlaneseq
        %v570 = vshrl.u32 %v569, 7
        %v571 = vsub.s32 3, %v570
        %v572 = vrot.slane %v555, %v571
        %v577 = vsel %vm138, %v560, 0.0
        %v578 = vsel %vm138, %v564, 0.0
        %v579 = vadd.f32 %v577, %v578
        %v580 = vsel %vm138, %v568, 0.0
        %v581 = vadd.f32 %v579, %v580
        %v582 = vsel %vm138, %v572, 0.0
        %v583 = vadd.f32 %v581, %v582
        %584 = vadd.xlane.f32.xlu0 %v583
        %v585 = vpop.xlane.xlu0 %584
        %v586 = vrot.slane %v585, 4
        %v587 = vadd.f32 %v585, %v586
        %v588 = vrot.slane %v587, 2
        %v589 = vadd.f32 %v587, %v588
        %v590 = vrot.slane %v589, 1
        %v591 = vadd.f32 %v589, %v590
        %s592 = vtos %v591
        %p593 = scmp.ge.f32.partialorder %s592, %s284
        %s594 = scalar_select %p593, %s552, %s551
        %s595 = sadd.s32 %s594, 16777216
        %v596 = vstv %s595
        %vm597 = vcmp.ge.s32.totalorder %v338, %v596
        %v598 = vsel %vm597, 1.0, 0.0
        %v600 = vlaneseq
        %v601 = vshrl.u32 %v600, 7
        %v602 = vsub.s32 0, %v601
        %v603 = vrot.slane %v598, %v602
        %v604 = vlaneseq
        %v605 = vshrl.u32 %v604, 7
        %v606 = vsub.s32 1, %v605
        %v607 = vrot.slane %v598, %v606
        %v608 = vlaneseq
        %v609 = vshrl.u32 %v608, 7
        %v610 = vsub.s32 2, %v609
        %v611 = vrot.slane %v598, %v610
        %v612 = vlaneseq
        %v613 = vshrl.u32 %v612, 7
        %v614 = vsub.s32 3, %v613
        %v615 = vrot.slane %v598, %v614
        %v620 = vsel %vm138, %v603, 0.0
        %v621 = vsel %vm138, %v607, 0.0
        %v622 = vadd.f32 %v620, %v621
        %v623 = vsel %vm138, %v611, 0.0
        %v624 = vadd.f32 %v622, %v623
        %v625 = vsel %vm138, %v615, 0.0
        %v626 = vadd.f32 %v624, %v625
        %627 = vadd.xlane.f32.xlu0 %v626
        %v628 = vpop.xlane.xlu0 %627
        %v629 = vrot.slane %v628, 4
        %v630 = vadd.f32 %v628, %v629
        %v631 = vrot.slane %v630, 2
        %v632 = vadd.f32 %v630, %v631
        %v633 = vrot.slane %v632, 1
        %v634 = vadd.f32 %v632, %v633
        %s635 = vtos %v634
        %p636 = scmp.ge.f32.partialorder %s635, %s284
        %s637 = scalar_select %p636, %s595, %s594
        %s638 = sadd.s32 %s637, 8388608
        %v639 = vstv %s638
        %vm640 = vcmp.ge.s32.totalorder %v338, %v639
        %v641 = vsel %vm640, 1.0, 0.0
        %v643 = vlaneseq
        %v644 = vshrl.u32 %v643, 7
        %v645 = vsub.s32 0, %v644
        %v646 = vrot.slane %v641, %v645
        %v647 = vlaneseq
        %v648 = vshrl.u32 %v647, 7
        %v649 = vsub.s32 1, %v648
        %v650 = vrot.slane %v641, %v649
        %v651 = vlaneseq
        %v652 = vshrl.u32 %v651, 7
        %v653 = vsub.s32 2, %v652
        %v654 = vrot.slane %v641, %v653
        %v655 = vlaneseq
        %v656 = vshrl.u32 %v655, 7
        %v657 = vsub.s32 3, %v656
        %v658 = vrot.slane %v641, %v657
        %v663 = vsel %vm138, %v646, 0.0
        %v664 = vsel %vm138, %v650, 0.0
        %v665 = vadd.f32 %v663, %v664
        %v666 = vsel %vm138, %v654, 0.0
        %v667 = vadd.f32 %v665, %v666
        %v668 = vsel %vm138, %v658, 0.0
        %v669 = vadd.f32 %v667, %v668
        %670 = vadd.xlane.f32.xlu0 %v669
        %v671 = vpop.xlane.xlu0 %670
        %v672 = vrot.slane %v671, 4
        %v673 = vadd.f32 %v671, %v672
        %v674 = vrot.slane %v673, 2
        %v675 = vadd.f32 %v673, %v674
        %v676 = vrot.slane %v675, 1
        %v677 = vadd.f32 %v675, %v676
        %s678 = vtos %v677
        %p679 = scmp.ge.f32.partialorder %s678, %s284
        %s680 = scalar_select %p679, %s638, %s637
        %s681 = sadd.s32 %s680, 4194304
        %v682 = vstv %s681
        %vm683 = vcmp.ge.s32.totalorder %v338, %v682
        %v684 = vsel %vm683, 1.0, 0.0
        %v686 = vlaneseq
        %v687 = vshrl.u32 %v686, 7
        %v688 = vsub.s32 0, %v687
        %v689 = vrot.slane %v684, %v688
        %v690 = vlaneseq
        %v691 = vshrl.u32 %v690, 7
        %v692 = vsub.s32 1, %v691
        %v693 = vrot.slane %v684, %v692
        %v694 = vlaneseq
        %v695 = vshrl.u32 %v694, 7
        %v696 = vsub.s32 2, %v695
        %v697 = vrot.slane %v684, %v696
        %v698 = vlaneseq
        %v699 = vshrl.u32 %v698, 7
        %v700 = vsub.s32 3, %v699
        %v701 = vrot.slane %v684, %v700
        %v706 = vsel %vm138, %v689, 0.0
        %v707 = vsel %vm138, %v693, 0.0
        %v708 = vadd.f32 %v706, %v707
        %v709 = vsel %vm138, %v697, 0.0
        %v710 = vadd.f32 %v708, %v709
        %v711 = vsel %vm138, %v701, 0.0
        %v712 = vadd.f32 %v710, %v711
        %713 = vadd.xlane.f32.xlu0 %v712
        %v714 = vpop.xlane.xlu0 %713
        %v715 = vrot.slane %v714, 4
        %v716 = vadd.f32 %v714, %v715
        %v717 = vrot.slane %v716, 2
        %v718 = vadd.f32 %v716, %v717
        %v719 = vrot.slane %v718, 1
        %v720 = vadd.f32 %v718, %v719
        %s721 = vtos %v720
        %p722 = scmp.ge.f32.partialorder %s721, %s284
        %s723 = scalar_select %p722, %s681, %s680
        %s724 = sadd.s32 %s723, 2097152
        %v725 = vstv %s724
        %vm726 = vcmp.ge.s32.totalorder %v338, %v725
        %v727 = vsel %vm726, 1.0, 0.0
        %v729 = vlaneseq
        %v730 = vshrl.u32 %v729, 7
        %v731 = vsub.s32 0, %v730
        %v732 = vrot.slane %v727, %v731
        %v733 = vlaneseq
        %v734 = vshrl.u32 %v733, 7
        %v735 = vsub.s32 1, %v734
        %v736 = vrot.slane %v727, %v735
        %v737 = vlaneseq
        %v738 = vshrl.u32 %v737, 7
        %v739 = vsub.s32 2, %v738
        %v740 = vrot.slane %v727, %v739
        %v741 = vlaneseq
        %v742 = vshrl.u32 %v741, 7
        %v743 = vsub.s32 3, %v742
        %v744 = vrot.slane %v727, %v743
        %v749 = vsel %vm138, %v732, 0.0
        %v750 = vsel %vm138, %v736, 0.0
        %v751 = vadd.f32 %v749, %v750
        %v752 = vsel %vm138, %v740, 0.0
        %v753 = vadd.f32 %v751, %v752
        %v754 = vsel %vm138, %v744, 0.0
        %v755 = vadd.f32 %v753, %v754
        %756 = vadd.xlane.f32.xlu0 %v755
        %v757 = vpop.xlane.xlu0 %756
        %v758 = vrot.slane %v757, 4
        %v759 = vadd.f32 %v757, %v758
        %v760 = vrot.slane %v759, 2
        %v761 = vadd.f32 %v759, %v760
        %v762 = vrot.slane %v761, 1
        %v763 = vadd.f32 %v761, %v762
        %s764 = vtos %v763
        %p765 = scmp.ge.f32.partialorder %s764, %s284
        %s766 = scalar_select %p765, %s724, %s723
        %s767 = sadd.s32 %s766, 1048576
        %v768 = vstv %s767
        %vm769 = vcmp.ge.s32.totalorder %v338, %v768
        %v770 = vsel %vm769, 1.0, 0.0
        %v772 = vlaneseq
        %v773 = vshrl.u32 %v772, 7
        %v774 = vsub.s32 0, %v773
        %v775 = vrot.slane %v770, %v774
        %v776 = vlaneseq
        %v777 = vshrl.u32 %v776, 7
        %v778 = vsub.s32 1, %v777
        %v779 = vrot.slane %v770, %v778
        %v780 = vlaneseq
        %v781 = vshrl.u32 %v780, 7
        %v782 = vsub.s32 2, %v781
        %v783 = vrot.slane %v770, %v782
        %v784 = vlaneseq
        %v785 = vshrl.u32 %v784, 7
        %v786 = vsub.s32 3, %v785
        %v787 = vrot.slane %v770, %v786
        %v792 = vsel %vm138, %v775, 0.0
        %v793 = vsel %vm138, %v779, 0.0
        %v794 = vadd.f32 %v792, %v793
        %v795 = vsel %vm138, %v783, 0.0
        %v796 = vadd.f32 %v794, %v795
        %v797 = vsel %vm138, %v787, 0.0
        %v798 = vadd.f32 %v796, %v797
        %799 = vadd.xlane.f32.xlu0 %v798
        %v800 = vpop.xlane.xlu0 %799
        %v801 = vrot.slane %v800, 4
        %v802 = vadd.f32 %v800, %v801
        %v803 = vrot.slane %v802, 2
        %v804 = vadd.f32 %v802, %v803
        %v805 = vrot.slane %v804, 1
        %v806 = vadd.f32 %v804, %v805
        %s807 = vtos %v806
        %p808 = scmp.ge.f32.partialorder %s807, %s284
        %s809 = scalar_select %p808, %s767, %s766
        %s810 = sadd.s32 %s809, 524288
        %v811 = vstv %s810
        %vm812 = vcmp.ge.s32.totalorder %v338, %v811
        %v813 = vsel %vm812, 1.0, 0.0
        %v815 = vlaneseq
        %v816 = vshrl.u32 %v815, 7
        %v817 = vsub.s32 0, %v816
        %v818 = vrot.slane %v813, %v817
        %v819 = vlaneseq
        %v820 = vshrl.u32 %v819, 7
        %v821 = vsub.s32 1, %v820
        %v822 = vrot.slane %v813, %v821
        %v823 = vlaneseq
        %v824 = vshrl.u32 %v823, 7
        %v825 = vsub.s32 2, %v824
        %v826 = vrot.slane %v813, %v825
        %v827 = vlaneseq
        %v828 = vshrl.u32 %v827, 7
        %v829 = vsub.s32 3, %v828
        %v830 = vrot.slane %v813, %v829
        %v835 = vsel %vm138, %v818, 0.0
        %v836 = vsel %vm138, %v822, 0.0
        %v837 = vadd.f32 %v835, %v836
        %v838 = vsel %vm138, %v826, 0.0
        %v839 = vadd.f32 %v837, %v838
        %v840 = vsel %vm138, %v830, 0.0
        %v841 = vadd.f32 %v839, %v840
        %842 = vadd.xlane.f32.xlu0 %v841
        %v843 = vpop.xlane.xlu0 %842
        %v844 = vrot.slane %v843, 4
        %v845 = vadd.f32 %v843, %v844
        %v846 = vrot.slane %v845, 2
        %v847 = vadd.f32 %v845, %v846
        %v848 = vrot.slane %v847, 1
        %v849 = vadd.f32 %v847, %v848
        %s850 = vtos %v849
        %p851 = scmp.ge.f32.partialorder %s850, %s284
        %s852 = scalar_select %p851, %s810, %s809
        %s853 = sadd.s32 %s852, 262144
        %v854 = vstv %s853
        %vm855 = vcmp.ge.s32.totalorder %v338, %v854
        %v856 = vsel %vm855, 1.0, 0.0
        %v858 = vlaneseq
        %v859 = vshrl.u32 %v858, 7
        %v860 = vsub.s32 0, %v859
        %v861 = vrot.slane %v856, %v860
        %v862 = vlaneseq
        %v863 = vshrl.u32 %v862, 7
        %v864 = vsub.s32 1, %v863
        %v865 = vrot.slane %v856, %v864
        %v866 = vlaneseq
        %v867 = vshrl.u32 %v866, 7
        %v868 = vsub.s32 2, %v867
        %v869 = vrot.slane %v856, %v868
        %v870 = vlaneseq
        %v871 = vshrl.u32 %v870, 7
        %v872 = vsub.s32 3, %v871
        %v873 = vrot.slane %v856, %v872
        %v878 = vsel %vm138, %v861, 0.0
        %v879 = vsel %vm138, %v865, 0.0
        %v880 = vadd.f32 %v878, %v879
        %v881 = vsel %vm138, %v869, 0.0
        %v882 = vadd.f32 %v880, %v881
        %v883 = vsel %vm138, %v873, 0.0
        %v884 = vadd.f32 %v882, %v883
        %885 = vadd.xlane.f32.xlu0 %v884
        %v886 = vpop.xlane.xlu0 %885
        %v887 = vrot.slane %v886, 4
        %v888 = vadd.f32 %v886, %v887
        %v889 = vrot.slane %v888, 2
        %v890 = vadd.f32 %v888, %v889
        %v891 = vrot.slane %v890, 1
        %v892 = vadd.f32 %v890, %v891
        %s893 = vtos %v892
        %p894 = scmp.ge.f32.partialorder %s893, %s284
        %s895 = scalar_select %p894, %s853, %s852
        %s896 = sadd.s32 %s895, 131072
        %v897 = vstv %s896
        %vm898 = vcmp.ge.s32.totalorder %v338, %v897
        %v899 = vsel %vm898, 1.0, 0.0
        %v901 = vlaneseq
        %v902 = vshrl.u32 %v901, 7
        %v903 = vsub.s32 0, %v902
        %v904 = vrot.slane %v899, %v903
        %v905 = vlaneseq
        %v906 = vshrl.u32 %v905, 7
        %v907 = vsub.s32 1, %v906
        %v908 = vrot.slane %v899, %v907
        %v909 = vlaneseq
        %v910 = vshrl.u32 %v909, 7
        %v911 = vsub.s32 2, %v910
        %v912 = vrot.slane %v899, %v911
        %v913 = vlaneseq
        %v914 = vshrl.u32 %v913, 7
        %v915 = vsub.s32 3, %v914
        %v916 = vrot.slane %v899, %v915
        %v921 = vsel %vm138, %v904, 0.0
        %v922 = vsel %vm138, %v908, 0.0
        %v923 = vadd.f32 %v921, %v922
        %v924 = vsel %vm138, %v912, 0.0
        %v925 = vadd.f32 %v923, %v924
        %v926 = vsel %vm138, %v916, 0.0
        %v927 = vadd.f32 %v925, %v926
        %928 = vadd.xlane.f32.xlu0 %v927
        %v929 = vpop.xlane.xlu0 %928
        %v930 = vrot.slane %v929, 4
        %v931 = vadd.f32 %v929, %v930
        %v932 = vrot.slane %v931, 2
        %v933 = vadd.f32 %v931, %v932
        %v934 = vrot.slane %v933, 1
        %v935 = vadd.f32 %v933, %v934
        %s936 = vtos %v935
        %p937 = scmp.ge.f32.partialorder %s936, %s284
        %s938 = scalar_select %p937, %s896, %s895
        %s939 = sadd.s32 %s938, 65536
        %v940 = vstv %s939
        %vm941 = vcmp.ge.s32.totalorder %v338, %v940
        %v942 = vsel %vm941, 1.0, 0.0
        %v944 = vlaneseq
        %v945 = vshrl.u32 %v944, 7
        %v946 = vsub.s32 0, %v945
        %v947 = vrot.slane %v942, %v946
        %v948 = vlaneseq
        %v949 = vshrl.u32 %v948, 7
        %v950 = vsub.s32 1, %v949
        %v951 = vrot.slane %v942, %v950
        %v952 = vlaneseq
        %v953 = vshrl.u32 %v952, 7
        %v954 = vsub.s32 2, %v953
        %v955 = vrot.slane %v942, %v954
        %v956 = vlaneseq
        %v957 = vshrl.u32 %v956, 7
        %v958 = vsub.s32 3, %v957
        %v959 = vrot.slane %v942, %v958
        %v964 = vsel %vm138, %v947, 0.0
        %v965 = vsel %vm138, %v951, 0.0
        %v966 = vadd.f32 %v964, %v965
        %v967 = vsel %vm138, %v955, 0.0
        %v968 = vadd.f32 %v966, %v967
        %v969 = vsel %vm138, %v959, 0.0
        %v970 = vadd.f32 %v968, %v969
        %971 = vadd.xlane.f32.xlu0 %v970
        %v972 = vpop.xlane.xlu0 %971
        %v973 = vrot.slane %v972, 4
        %v974 = vadd.f32 %v972, %v973
        %v975 = vrot.slane %v974, 2
        %v976 = vadd.f32 %v974, %v975
        %v977 = vrot.slane %v976, 1
        %v978 = vadd.f32 %v976, %v977
        %s979 = vtos %v978
        %p980 = scmp.ge.f32.partialorder %s979, %s284
        %s981 = scalar_select %p980, %s939, %s938
        %s982 = sadd.s32 %s981, 32768
        %v983 = vstv %s982
        %vm984 = vcmp.ge.s32.totalorder %v338, %v983
        %v985 = vsel %vm984, 1.0, 0.0
        %v987 = vlaneseq
        %v988 = vshrl.u32 %v987, 7
        %v989 = vsub.s32 0, %v988
        %v990 = vrot.slane %v985, %v989
        %v991 = vlaneseq
        %v992 = vshrl.u32 %v991, 7
        %v993 = vsub.s32 1, %v992
        %v994 = vrot.slane %v985, %v993
        %v995 = vlaneseq
        %v996 = vshrl.u32 %v995, 7
        %v997 = vsub.s32 2, %v996
        %v998 = vrot.slane %v985, %v997
        %v999 = vlaneseq
        %v1000 = vshrl.u32 %v999, 7
        %v1001 = vsub.s32 3, %v1000
        %v1002 = vrot.slane %v985, %v1001
        %v1007 = vsel %vm138, %v990, 0.0
        %v1008 = vsel %vm138, %v994, 0.0
        %v1009 = vadd.f32 %v1007, %v1008
        %v1010 = vsel %vm138, %v998, 0.0
        %v1011 = vadd.f32 %v1009, %v1010
        %v1012 = vsel %vm138, %v1002, 0.0
        %v1013 = vadd.f32 %v1011, %v1012
        %1014 = vadd.xlane.f32.xlu0 %v1013
        %v1015 = vpop.xlane.xlu0 %1014
        %v1016 = vrot.slane %v1015, 4
        %v1017 = vadd.f32 %v1015, %v1016
        %v1018 = vrot.slane %v1017, 2
        %v1019 = vadd.f32 %v1017, %v1018
        %v1020 = vrot.slane %v1019, 1
        %v1021 = vadd.f32 %v1019, %v1020
        %s1022 = vtos %v1021
        %p1023 = scmp.ge.f32.partialorder %s1022, %s284
        %s1024 = scalar_select %p1023, %s982, %s981
        %s1025 = sadd.s32 %s1024, 16384
        %v1026 = vstv %s1025
        %vm1027 = vcmp.ge.s32.totalorder %v338, %v1026
        %v1028 = vsel %vm1027, 1.0, 0.0
        %v1030 = vlaneseq
        %v1031 = vshrl.u32 %v1030, 7
        %v1032 = vsub.s32 0, %v1031
        %v1033 = vrot.slane %v1028, %v1032
        %v1034 = vlaneseq
        %v1035 = vshrl.u32 %v1034, 7
        %v1036 = vsub.s32 1, %v1035
        %v1037 = vrot.slane %v1028, %v1036
        %v1038 = vlaneseq
        %v1039 = vshrl.u32 %v1038, 7
        %v1040 = vsub.s32 2, %v1039
        %v1041 = vrot.slane %v1028, %v1040
        %v1042 = vlaneseq
        %v1043 = vshrl.u32 %v1042, 7
        %v1044 = vsub.s32 3, %v1043
        %v1045 = vrot.slane %v1028, %v1044
        %v1050 = vsel %vm138, %v1033, 0.0
        %v1051 = vsel %vm138, %v1037, 0.0
        %v1052 = vadd.f32 %v1050, %v1051
        %v1053 = vsel %vm138, %v1041, 0.0
        %v1054 = vadd.f32 %v1052, %v1053
        %v1055 = vsel %vm138, %v1045, 0.0
        %v1056 = vadd.f32 %v1054, %v1055
        %1057 = vadd.xlane.f32.xlu0 %v1056
        %v1058 = vpop.xlane.xlu0 %1057
        %v1059 = vrot.slane %v1058, 4
        %v1060 = vadd.f32 %v1058, %v1059
        %v1061 = vrot.slane %v1060, 2
        %v1062 = vadd.f32 %v1060, %v1061
        %v1063 = vrot.slane %v1062, 1
        %v1064 = vadd.f32 %v1062, %v1063
        %s1065 = vtos %v1064
        %p1066 = scmp.ge.f32.partialorder %s1065, %s284
        %s1067 = scalar_select %p1066, %s1025, %s1024
        %s1068 = sadd.s32 %s1067, 8192
        %v1069 = vstv %s1068
        %vm1070 = vcmp.ge.s32.totalorder %v338, %v1069
        %v1071 = vsel %vm1070, 1.0, 0.0
        %v1073 = vlaneseq
        %v1074 = vshrl.u32 %v1073, 7
        %v1075 = vsub.s32 0, %v1074
        %v1076 = vrot.slane %v1071, %v1075
        %v1077 = vlaneseq
        %v1078 = vshrl.u32 %v1077, 7
        %v1079 = vsub.s32 1, %v1078
        %v1080 = vrot.slane %v1071, %v1079
        %v1081 = vlaneseq
        %v1082 = vshrl.u32 %v1081, 7
        %v1083 = vsub.s32 2, %v1082
        %v1084 = vrot.slane %v1071, %v1083
        %v1085 = vlaneseq
        %v1086 = vshrl.u32 %v1085, 7
        %v1087 = vsub.s32 3, %v1086
        %v1088 = vrot.slane %v1071, %v1087
        %v1093 = vsel %vm138, %v1076, 0.0
        %v1094 = vsel %vm138, %v1080, 0.0
        %v1095 = vadd.f32 %v1093, %v1094
        %v1096 = vsel %vm138, %v1084, 0.0
        %v1097 = vadd.f32 %v1095, %v1096
        %v1098 = vsel %vm138, %v1088, 0.0
        %v1099 = vadd.f32 %v1097, %v1098
        %1100 = vadd.xlane.f32.xlu0 %v1099
        %v1101 = vpop.xlane.xlu0 %1100
        %v1102 = vrot.slane %v1101, 4
        %v1103 = vadd.f32 %v1101, %v1102
        %v1104 = vrot.slane %v1103, 2
        %v1105 = vadd.f32 %v1103, %v1104
        %v1106 = vrot.slane %v1105, 1
        %v1107 = vadd.f32 %v1105, %v1106
        %s1108 = vtos %v1107
        %p1109 = scmp.ge.f32.partialorder %s1108, %s284
        %s1110 = scalar_select %p1109, %s1068, %s1067
        %s1111 = sadd.s32 %s1110, 4096
        %v1112 = vstv %s1111
        %vm1113 = vcmp.ge.s32.totalorder %v338, %v1112
        %v1114 = vsel %vm1113, 1.0, 0.0
        %v1116 = vlaneseq
        %v1117 = vshrl.u32 %v1116, 7
        %v1118 = vsub.s32 0, %v1117
        %v1119 = vrot.slane %v1114, %v1118
        %v1120 = vlaneseq
        %v1121 = vshrl.u32 %v1120, 7
        %v1122 = vsub.s32 1, %v1121
        %v1123 = vrot.slane %v1114, %v1122
        %v1124 = vlaneseq
        %v1125 = vshrl.u32 %v1124, 7
        %v1126 = vsub.s32 2, %v1125
        %v1127 = vrot.slane %v1114, %v1126
        %v1128 = vlaneseq
        %v1129 = vshrl.u32 %v1128, 7
        %v1130 = vsub.s32 3, %v1129
        %v1131 = vrot.slane %v1114, %v1130
        %v1136 = vsel %vm138, %v1119, 0.0
        %v1137 = vsel %vm138, %v1123, 0.0
        %v1138 = vadd.f32 %v1136, %v1137
        %v1139 = vsel %vm138, %v1127, 0.0
        %v1140 = vadd.f32 %v1138, %v1139
        %v1141 = vsel %vm138, %v1131, 0.0
        %v1142 = vadd.f32 %v1140, %v1141
        %1143 = vadd.xlane.f32.xlu0 %v1142
        %v1144 = vpop.xlane.xlu0 %1143
        %v1145 = vrot.slane %v1144, 4
        %v1146 = vadd.f32 %v1144, %v1145
        %v1147 = vrot.slane %v1146, 2
        %v1148 = vadd.f32 %v1146, %v1147
        %v1149 = vrot.slane %v1148, 1
        %v1150 = vadd.f32 %v1148, %v1149
        %s1151 = vtos %v1150
        %p1152 = scmp.ge.f32.partialorder %s1151, %s284
        %s1153 = scalar_select %p1152, %s1111, %s1110
        %s1154 = sadd.s32 %s1153, 2048
        %v1155 = vstv %s1154
        %vm1156 = vcmp.ge.s32.totalorder %v338, %v1155
        %v1157 = vsel %vm1156, 1.0, 0.0
        %v1159 = vlaneseq
        %v1160 = vshrl.u32 %v1159, 7
        %v1161 = vsub.s32 0, %v1160
        %v1162 = vrot.slane %v1157, %v1161
        %v1163 = vlaneseq
        %v1164 = vshrl.u32 %v1163, 7
        %v1165 = vsub.s32 1, %v1164
        %v1166 = vrot.slane %v1157, %v1165
        %v1167 = vlaneseq
        %v1168 = vshrl.u32 %v1167, 7
        %v1169 = vsub.s32 2, %v1168
        %v1170 = vrot.slane %v1157, %v1169
        %v1171 = vlaneseq
        %v1172 = vshrl.u32 %v1171, 7
        %v1173 = vsub.s32 3, %v1172
        %v1174 = vrot.slane %v1157, %v1173
        %v1179 = vsel %vm138, %v1162, 0.0
        %v1180 = vsel %vm138, %v1166, 0.0
        %v1181 = vadd.f32 %v1179, %v1180
        %v1182 = vsel %vm138, %v1170, 0.0
        %v1183 = vadd.f32 %v1181, %v1182
        %v1184 = vsel %vm138, %v1174, 0.0
        %v1185 = vadd.f32 %v1183, %v1184
        %1186 = vadd.xlane.f32.xlu0 %v1185
        %v1187 = vpop.xlane.xlu0 %1186
        %v1188 = vrot.slane %v1187, 4
        %v1189 = vadd.f32 %v1187, %v1188
        %v1190 = vrot.slane %v1189, 2
        %v1191 = vadd.f32 %v1189, %v1190
        %v1192 = vrot.slane %v1191, 1
        %v1193 = vadd.f32 %v1191, %v1192
        %s1194 = vtos %v1193
        %p1195 = scmp.ge.f32.partialorder %s1194, %s284
        %s1196 = scalar_select %p1195, %s1154, %s1153
        %s1197 = sadd.s32 %s1196, 1024
        %v1198 = vstv %s1197
        %vm1199 = vcmp.ge.s32.totalorder %v338, %v1198
        %v1200 = vsel %vm1199, 1.0, 0.0
        %v1202 = vlaneseq
        %v1203 = vshrl.u32 %v1202, 7
        %v1204 = vsub.s32 0, %v1203
        %v1205 = vrot.slane %v1200, %v1204
        %v1206 = vlaneseq
        %v1207 = vshrl.u32 %v1206, 7
        %v1208 = vsub.s32 1, %v1207
        %v1209 = vrot.slane %v1200, %v1208
        %v1210 = vlaneseq
        %v1211 = vshrl.u32 %v1210, 7
        %v1212 = vsub.s32 2, %v1211
        %v1213 = vrot.slane %v1200, %v1212
        %v1214 = vlaneseq
        %v1215 = vshrl.u32 %v1214, 7
        %v1216 = vsub.s32 3, %v1215
        %v1217 = vrot.slane %v1200, %v1216
        %v1222 = vsel %vm138, %v1205, 0.0
        %v1223 = vsel %vm138, %v1209, 0.0
        %v1224 = vadd.f32 %v1222, %v1223
        %v1225 = vsel %vm138, %v1213, 0.0
        %v1226 = vadd.f32 %v1224, %v1225
        %v1227 = vsel %vm138, %v1217, 0.0
        %v1228 = vadd.f32 %v1226, %v1227
        %1229 = vadd.xlane.f32.xlu0 %v1228
        %v1230 = vpop.xlane.xlu0 %1229
        %v1231 = vrot.slane %v1230, 4
        %v1232 = vadd.f32 %v1230, %v1231
        %v1233 = vrot.slane %v1232, 2
        %v1234 = vadd.f32 %v1232, %v1233
        %v1235 = vrot.slane %v1234, 1
        %v1236 = vadd.f32 %v1234, %v1235
        %s1237 = vtos %v1236
        %p1238 = scmp.ge.f32.partialorder %s1237, %s284
        %s1239 = scalar_select %p1238, %s1197, %s1196
        %s1240 = sadd.s32 %s1239, 512
        %v1241 = vstv %s1240
        %vm1242 = vcmp.ge.s32.totalorder %v338, %v1241
        %v1243 = vsel %vm1242, 1.0, 0.0
        %v1245 = vlaneseq
        %v1246 = vshrl.u32 %v1245, 7
        %v1247 = vsub.s32 0, %v1246
        %v1248 = vrot.slane %v1243, %v1247
        %v1249 = vlaneseq
        %v1250 = vshrl.u32 %v1249, 7
        %v1251 = vsub.s32 1, %v1250
        %v1252 = vrot.slane %v1243, %v1251
        %v1253 = vlaneseq
        %v1254 = vshrl.u32 %v1253, 7
        %v1255 = vsub.s32 2, %v1254
        %v1256 = vrot.slane %v1243, %v1255
        %v1257 = vlaneseq
        %v1258 = vshrl.u32 %v1257, 7
        %v1259 = vsub.s32 3, %v1258
        %v1260 = vrot.slane %v1243, %v1259
        %v1265 = vsel %vm138, %v1248, 0.0
        %v1266 = vsel %vm138, %v1252, 0.0
        %v1267 = vadd.f32 %v1265, %v1266
        %v1268 = vsel %vm138, %v1256, 0.0
        %v1269 = vadd.f32 %v1267, %v1268
        %v1270 = vsel %vm138, %v1260, 0.0
        %v1271 = vadd.f32 %v1269, %v1270
        %1272 = vadd.xlane.f32.xlu0 %v1271
        %v1273 = vpop.xlane.xlu0 %1272
        %v1274 = vrot.slane %v1273, 4
        %v1275 = vadd.f32 %v1273, %v1274
        %v1276 = vrot.slane %v1275, 2
        %v1277 = vadd.f32 %v1275, %v1276
        %v1278 = vrot.slane %v1277, 1
        %v1279 = vadd.f32 %v1277, %v1278
        %s1280 = vtos %v1279
        %p1281 = scmp.ge.f32.partialorder %s1280, %s284
        %s1282 = scalar_select %p1281, %s1240, %s1239
        %s1283 = sadd.s32 %s1282, 256
        %v1284 = vstv %s1283
        %vm1285 = vcmp.ge.s32.totalorder %v338, %v1284
        %v1286 = vsel %vm1285, 1.0, 0.0
        %v1288 = vlaneseq
        %v1289 = vshrl.u32 %v1288, 7
        %v1290 = vsub.s32 0, %v1289
        %v1291 = vrot.slane %v1286, %v1290
        %v1292 = vlaneseq
        %v1293 = vshrl.u32 %v1292, 7
        %v1294 = vsub.s32 1, %v1293
        %v1295 = vrot.slane %v1286, %v1294
        %v1296 = vlaneseq
        %v1297 = vshrl.u32 %v1296, 7
        %v1298 = vsub.s32 2, %v1297
        %v1299 = vrot.slane %v1286, %v1298
        %v1300 = vlaneseq
        %v1301 = vshrl.u32 %v1300, 7
        %v1302 = vsub.s32 3, %v1301
        %v1303 = vrot.slane %v1286, %v1302
        %v1308 = vsel %vm138, %v1291, 0.0
        %v1309 = vsel %vm138, %v1295, 0.0
        %v1310 = vadd.f32 %v1308, %v1309
        %v1311 = vsel %vm138, %v1299, 0.0
        %v1312 = vadd.f32 %v1310, %v1311
        %v1313 = vsel %vm138, %v1303, 0.0
        %v1314 = vadd.f32 %v1312, %v1313
        %1315 = vadd.xlane.f32.xlu0 %v1314
        %v1316 = vpop.xlane.xlu0 %1315
        %v1317 = vrot.slane %v1316, 4
        %v1318 = vadd.f32 %v1316, %v1317
        %v1319 = vrot.slane %v1318, 2
        %v1320 = vadd.f32 %v1318, %v1319
        %v1321 = vrot.slane %v1320, 1
        %v1322 = vadd.f32 %v1320, %v1321
        %s1323 = vtos %v1322
        %p1324 = scmp.ge.f32.partialorder %s1323, %s284
        %s1325 = scalar_select %p1324, %s1283, %s1282
        %s1326 = sadd.s32 %s1325, 128
        %v1327 = vstv %s1326
        %vm1328 = vcmp.ge.s32.totalorder %v338, %v1327
        %v1329 = vsel %vm1328, 1.0, 0.0
        %v1331 = vlaneseq
        %v1332 = vshrl.u32 %v1331, 7
        %v1333 = vsub.s32 0, %v1332
        %v1334 = vrot.slane %v1329, %v1333
        %v1335 = vlaneseq
        %v1336 = vshrl.u32 %v1335, 7
        %v1337 = vsub.s32 1, %v1336
        %v1338 = vrot.slane %v1329, %v1337
        %v1339 = vlaneseq
        %v1340 = vshrl.u32 %v1339, 7
        %v1341 = vsub.s32 2, %v1340
        %v1342 = vrot.slane %v1329, %v1341
        %v1343 = vlaneseq
        %v1344 = vshrl.u32 %v1343, 7
        %v1345 = vsub.s32 3, %v1344
        %v1346 = vrot.slane %v1329, %v1345
        %v1351 = vsel %vm138, %v1334, 0.0
        %v1352 = vsel %vm138, %v1338, 0.0
        %v1353 = vadd.f32 %v1351, %v1352
        %v1354 = vsel %vm138, %v1342, 0.0
        %v1355 = vadd.f32 %v1353, %v1354
        %v1356 = vsel %vm138, %v1346, 0.0
        %v1357 = vadd.f32 %v1355, %v1356
        %1358 = vadd.xlane.f32.xlu0 %v1357
        %v1359 = vpop.xlane.xlu0 %1358
        %v1360 = vrot.slane %v1359, 4
        %v1361 = vadd.f32 %v1359, %v1360
        %v1362 = vrot.slane %v1361, 2
        %v1363 = vadd.f32 %v1361, %v1362
        %v1364 = vrot.slane %v1363, 1
        %v1365 = vadd.f32 %v1363, %v1364
        %s1366 = vtos %v1365
        %p1367 = scmp.ge.f32.partialorder %s1366, %s284
        %s1368 = scalar_select %p1367, %s1326, %s1325
        %s1369 = sadd.s32 %s1368, 64
        %v1370 = vstv %s1369
        %vm1371 = vcmp.ge.s32.totalorder %v338, %v1370
        %v1372 = vsel %vm1371, 1.0, 0.0
        %v1374 = vlaneseq
        %v1375 = vshrl.u32 %v1374, 7
        %v1376 = vsub.s32 0, %v1375
        %v1377 = vrot.slane %v1372, %v1376
        %v1378 = vlaneseq
        %v1379 = vshrl.u32 %v1378, 7
        %v1380 = vsub.s32 1, %v1379
        %v1381 = vrot.slane %v1372, %v1380
        %v1382 = vlaneseq
        %v1383 = vshrl.u32 %v1382, 7
        %v1384 = vsub.s32 2, %v1383
        %v1385 = vrot.slane %v1372, %v1384
        %v1386 = vlaneseq
        %v1387 = vshrl.u32 %v1386, 7
        %v1388 = vsub.s32 3, %v1387
        %v1389 = vrot.slane %v1372, %v1388
        %v1394 = vsel %vm138, %v1377, 0.0
        %v1395 = vsel %vm138, %v1381, 0.0
        %v1396 = vadd.f32 %v1394, %v1395
        %v1397 = vsel %vm138, %v1385, 0.0
        %v1398 = vadd.f32 %v1396, %v1397
        %v1399 = vsel %vm138, %v1389, 0.0
        %v1400 = vadd.f32 %v1398, %v1399
        %1401 = vadd.xlane.f32.xlu0 %v1400
        %v1402 = vpop.xlane.xlu0 %1401
        %v1403 = vrot.slane %v1402, 4
        %v1404 = vadd.f32 %v1402, %v1403
        %v1405 = vrot.slane %v1404, 2
        %v1406 = vadd.f32 %v1404, %v1405
        %v1407 = vrot.slane %v1406, 1
        %v1408 = vadd.f32 %v1406, %v1407
        %s1409 = vtos %v1408
        %p1410 = scmp.ge.f32.partialorder %s1409, %s284
        %s1411 = scalar_select %p1410, %s1369, %s1368
        %s1412 = sadd.s32 %s1411, 32
        %v1413 = vstv %s1412
        %vm1414 = vcmp.ge.s32.totalorder %v338, %v1413
        %v1415 = vsel %vm1414, 1.0, 0.0
        %v1417 = vlaneseq
        %v1418 = vshrl.u32 %v1417, 7
        %v1419 = vsub.s32 0, %v1418
        %v1420 = vrot.slane %v1415, %v1419
        %v1421 = vlaneseq
        %v1422 = vshrl.u32 %v1421, 7
        %v1423 = vsub.s32 1, %v1422
        %v1424 = vrot.slane %v1415, %v1423
        %v1425 = vlaneseq
        %v1426 = vshrl.u32 %v1425, 7
        %v1427 = vsub.s32 2, %v1426
        %v1428 = vrot.slane %v1415, %v1427
        %v1429 = vlaneseq
        %v1430 = vshrl.u32 %v1429, 7
        %v1431 = vsub.s32 3, %v1430
        %v1432 = vrot.slane %v1415, %v1431
        %v1437 = vsel %vm138, %v1420, 0.0
        %v1438 = vsel %vm138, %v1424, 0.0
        %v1439 = vadd.f32 %v1437, %v1438
        %v1440 = vsel %vm138, %v1428, 0.0
        %v1441 = vadd.f32 %v1439, %v1440
        %v1442 = vsel %vm138, %v1432, 0.0
        %v1443 = vadd.f32 %v1441, %v1442
        %1444 = vadd.xlane.f32.xlu0 %v1443
        %v1445 = vpop.xlane.xlu0 %1444
        %v1446 = vrot.slane %v1445, 4
        %v1447 = vadd.f32 %v1445, %v1446
        %v1448 = vrot.slane %v1447, 2
        %v1449 = vadd.f32 %v1447, %v1448
        %v1450 = vrot.slane %v1449, 1
        %v1451 = vadd.f32 %v1449, %v1450
        %s1452 = vtos %v1451
        %p1453 = scmp.ge.f32.partialorder %s1452, %s284
        %s1454 = scalar_select %p1453, %s1412, %s1411
        %s1455 = sadd.s32 %s1454, 16
        %v1456 = vstv %s1455
        %vm1457 = vcmp.ge.s32.totalorder %v338, %v1456
        %v1458 = vsel %vm1457, 1.0, 0.0
        %v1460 = vlaneseq
        %v1461 = vshrl.u32 %v1460, 7
        %v1462 = vsub.s32 0, %v1461
        %v1463 = vrot.slane %v1458, %v1462
        %v1464 = vlaneseq
        %v1465 = vshrl.u32 %v1464, 7
        %v1466 = vsub.s32 1, %v1465
        %v1467 = vrot.slane %v1458, %v1466
        %v1468 = vlaneseq
        %v1469 = vshrl.u32 %v1468, 7
        %v1470 = vsub.s32 2, %v1469
        %v1471 = vrot.slane %v1458, %v1470
        %v1472 = vlaneseq
        %v1473 = vshrl.u32 %v1472, 7
        %v1474 = vsub.s32 3, %v1473
        %v1475 = vrot.slane %v1458, %v1474
        %v1480 = vsel %vm138, %v1463, 0.0
        %v1481 = vsel %vm138, %v1467, 0.0
        %v1482 = vadd.f32 %v1480, %v1481
        %v1483 = vsel %vm138, %v1471, 0.0
        %v1484 = vadd.f32 %v1482, %v1483
        %v1485 = vsel %vm138, %v1475, 0.0
        %v1486 = vadd.f32 %v1484, %v1485
        %1487 = vadd.xlane.f32.xlu0 %v1486
        %v1488 = vpop.xlane.xlu0 %1487
        %v1489 = vrot.slane %v1488, 4
        %v1490 = vadd.f32 %v1488, %v1489
        %v1491 = vrot.slane %v1490, 2
        %v1492 = vadd.f32 %v1490, %v1491
        %v1493 = vrot.slane %v1492, 1
        %v1494 = vadd.f32 %v1492, %v1493
        %s1495 = vtos %v1494
        %p1496 = scmp.ge.f32.partialorder %s1495, %s284
        %s1497 = scalar_select %p1496, %s1455, %s1454
        %s1498 = sadd.s32 %s1497, 8
        %v1499 = vstv %s1498
        %vm1500 = vcmp.ge.s32.totalorder %v338, %v1499
        %v1501 = vsel %vm1500, 1.0, 0.0
        %v1503 = vlaneseq
        %v1504 = vshrl.u32 %v1503, 7
        %v1505 = vsub.s32 0, %v1504
        %v1506 = vrot.slane %v1501, %v1505
        %v1507 = vlaneseq
        %v1508 = vshrl.u32 %v1507, 7
        %v1509 = vsub.s32 1, %v1508
        %v1510 = vrot.slane %v1501, %v1509
        %v1511 = vlaneseq
        %v1512 = vshrl.u32 %v1511, 7
        %v1513 = vsub.s32 2, %v1512
        %v1514 = vrot.slane %v1501, %v1513
        %v1515 = vlaneseq
        %v1516 = vshrl.u32 %v1515, 7
        %v1517 = vsub.s32 3, %v1516
        %v1518 = vrot.slane %v1501, %v1517
        %v1523 = vsel %vm138, %v1506, 0.0
        %v1524 = vsel %vm138, %v1510, 0.0
        %v1525 = vadd.f32 %v1523, %v1524
        %v1526 = vsel %vm138, %v1514, 0.0
        %v1527 = vadd.f32 %v1525, %v1526
        %v1528 = vsel %vm138, %v1518, 0.0
        %v1529 = vadd.f32 %v1527, %v1528
        %1530 = vadd.xlane.f32.xlu0 %v1529
        %v1531 = vpop.xlane.xlu0 %1530
        %v1532 = vrot.slane %v1531, 4
        %v1533 = vadd.f32 %v1531, %v1532
        %v1534 = vrot.slane %v1533, 2
        %v1535 = vadd.f32 %v1533, %v1534
        %v1536 = vrot.slane %v1535, 1
        %v1537 = vadd.f32 %v1535, %v1536
        %s1538 = vtos %v1537
        %p1539 = scmp.ge.f32.partialorder %s1538, %s284
        %s1540 = scalar_select %p1539, %s1498, %s1497
        %s1541 = sadd.s32 %s1540, 4
        %v1542 = vstv %s1541
        %vm1543 = vcmp.ge.s32.totalorder %v338, %v1542
        %v1544 = vsel %vm1543, 1.0, 0.0
        %v1546 = vlaneseq
        %v1547 = vshrl.u32 %v1546, 7
        %v1548 = vsub.s32 0, %v1547
        %v1549 = vrot.slane %v1544, %v1548
        %v1550 = vlaneseq
        %v1551 = vshrl.u32 %v1550, 7
        %v1552 = vsub.s32 1, %v1551
        %v1553 = vrot.slane %v1544, %v1552
        %v1554 = vlaneseq
        %v1555 = vshrl.u32 %v1554, 7
        %v1556 = vsub.s32 2, %v1555
        %v1557 = vrot.slane %v1544, %v1556
        %v1558 = vlaneseq
        %v1559 = vshrl.u32 %v1558, 7
        %v1560 = vsub.s32 3, %v1559
        %v1561 = vrot.slane %v1544, %v1560
        %v1566 = vsel %vm138, %v1549, 0.0
        %v1567 = vsel %vm138, %v1553, 0.0
        %v1568 = vadd.f32 %v1566, %v1567
        %v1569 = vsel %vm138, %v1557, 0.0
        %v1570 = vadd.f32 %v1568, %v1569
        %v1571 = vsel %vm138, %v1561, 0.0
        %v1572 = vadd.f32 %v1570, %v1571
        %1573 = vadd.xlane.f32.xlu0 %v1572
        %v1574 = vpop.xlane.xlu0 %1573
        %v1575 = vrot.slane %v1574, 4
        %v1576 = vadd.f32 %v1574, %v1575
        %v1577 = vrot.slane %v1576, 2
        %v1578 = vadd.f32 %v1576, %v1577
        %v1579 = vrot.slane %v1578, 1
        %v1580 = vadd.f32 %v1578, %v1579
        %s1581 = vtos %v1580
        %p1582 = scmp.ge.f32.partialorder %s1581, %s284
        %s1583 = scalar_select %p1582, %s1541, %s1540
        %s1584 = sadd.s32 %s1583, 2
        %v1585 = vstv %s1584
        %vm1586 = vcmp.ge.s32.totalorder %v338, %v1585
        %v1587 = vsel %vm1586, 1.0, 0.0
        %v1589 = vlaneseq
        %v1590 = vshrl.u32 %v1589, 7
        %v1591 = vsub.s32 0, %v1590
        %v1592 = vrot.slane %v1587, %v1591
        %v1593 = vlaneseq
        %v1594 = vshrl.u32 %v1593, 7
        %v1595 = vsub.s32 1, %v1594
        %v1596 = vrot.slane %v1587, %v1595
        %v1597 = vlaneseq
        %v1598 = vshrl.u32 %v1597, 7
        %v1599 = vsub.s32 2, %v1598
        %v1600 = vrot.slane %v1587, %v1599
        %v1601 = vlaneseq
        %v1602 = vshrl.u32 %v1601, 7
        %v1603 = vsub.s32 3, %v1602
        %v1604 = vrot.slane %v1587, %v1603
        %v1609 = vsel %vm138, %v1592, 0.0
        %v1610 = vsel %vm138, %v1596, 0.0
        %v1611 = vadd.f32 %v1609, %v1610
        %v1612 = vsel %vm138, %v1600, 0.0
        %v1613 = vadd.f32 %v1611, %v1612
        %v1614 = vsel %vm138, %v1604, 0.0
        %v1615 = vadd.f32 %v1613, %v1614
        %1616 = vadd.xlane.f32.xlu0 %v1615
        %v1617 = vpop.xlane.xlu0 %1616
        %v1618 = vrot.slane %v1617, 4
        %v1619 = vadd.f32 %v1617, %v1618
        %v1620 = vrot.slane %v1619, 2
        %v1621 = vadd.f32 %v1619, %v1620
        %v1622 = vrot.slane %v1621, 1
        %v1623 = vadd.f32 %v1621, %v1622
        %s1624 = vtos %v1623
        %p1625 = scmp.ge.f32.partialorder %s1624, %s284
        %s1626 = scalar_select %p1625, %s1584, %s1583
        %s1627 = sadd.s32 %s1626, 1
        %v1628 = vstv %s1627
        %vm1629 = vcmp.ge.s32.totalorder %v338, %v1628
        %v1630 = vsel %vm1629, 1.0, 0.0
        %v1632 = vlaneseq
        %v1633 = vshrl.u32 %v1632, 7
        %v1634 = vsub.s32 0, %v1633
        %v1635 = vrot.slane %v1630, %v1634
        %v1636 = vlaneseq
        %v1637 = vshrl.u32 %v1636, 7
        %v1638 = vsub.s32 1, %v1637
        %v1639 = vrot.slane %v1630, %v1638
        %v1640 = vlaneseq
        %v1641 = vshrl.u32 %v1640, 7
        %v1642 = vsub.s32 2, %v1641
        %v1643 = vrot.slane %v1630, %v1642
        %v1644 = vlaneseq
        %v1645 = vshrl.u32 %v1644, 7
        %v1646 = vsub.s32 3, %v1645
        %v1647 = vrot.slane %v1630, %v1646
        %v1652 = vsel %vm138, %v1635, 0.0
        %v1653 = vsel %vm138, %v1639, 0.0
        %v1654 = vadd.f32 %v1652, %v1653
        %v1655 = vsel %vm138, %v1643, 0.0
        %v1656 = vadd.f32 %v1654, %v1655
        %v1657 = vsel %vm138, %v1647, 0.0
        %v1658 = vadd.f32 %v1656, %v1657
        %1659 = vadd.xlane.f32.xlu0 %v1658
        %v1660 = vpop.xlane.xlu0 %1659
        %v1661 = vrot.slane %v1660, 4
        %v1662 = vadd.f32 %v1660, %v1661
        %v1663 = vrot.slane %v1662, 2
        %v1664 = vadd.f32 %v1662, %v1663
        %v1665 = vrot.slane %v1664, 1
        %v1666 = vadd.f32 %v1664, %v1665
        %s1667 = vtos %v1666
        %p1668 = scmp.ge.f32.partialorder %s1667, %s284
        %s1669 = scalar_select %p1668, %s1627, %s1626
        %v1670 = vstv %s1669
        %vm1671 = vcmp.gt.s32.totalorder %v338, %v1670
        %v1672 = vsel %vm1671, 1.0, 0.0
        %v1674 = vlaneseq
        %v1675 = vshrl.u32 %v1674, 7
        %v1676 = vsub.s32 0, %v1675
        %v1677 = vrot.slane %v1672, %v1676
        %v1678 = vlaneseq
        %v1679 = vshrl.u32 %v1678, 7
        %v1680 = vsub.s32 1, %v1679
        %v1681 = vrot.slane %v1672, %v1680
        %v1682 = vlaneseq
        %v1683 = vshrl.u32 %v1682, 7
        %v1684 = vsub.s32 2, %v1683
        %v1685 = vrot.slane %v1672, %v1684
        %v1686 = vlaneseq
        %v1687 = vshrl.u32 %v1686, 7
        %v1688 = vsub.s32 3, %v1687
        %v1689 = vrot.slane %v1672, %v1688
        %v1694 = vsel %vm138, %v1677, 0.0
        %v1695 = vsel %vm138, %v1681, 0.0
        %v1696 = vadd.f32 %v1694, %v1695
        %v1697 = vsel %vm138, %v1685, 0.0
        %v1698 = vadd.f32 %v1696, %v1697
        %v1699 = vsel %vm138, %v1689, 0.0
        %v1700 = vadd.f32 %v1698, %v1699
        %1701 = vadd.xlane.f32.xlu0 %v1700
        %v1702 = vpop.xlane.xlu0 %1701
        %v1703 = vrot.slane %v1702, 4
        %v1704 = vadd.f32 %v1702, %v1703
        %v1705 = vrot.slane %v1704, 2
        %v1706 = vadd.f32 %v1704, %v1705
        %v1707 = vrot.slane %v1706, 1
        %v1708 = vadd.f32 %v1706, %v1707
        %s1709 = vtos %v1708
        %s1710 = ssub.f32 %s284, %s1709
        %vm1711 = vcmp.eq.s32.totalorder %v338, %v1670
        %v1712 = vsel %vm1711, %v110, -inf
        %v1714 = vlaneseq
        %v1715 = vshrl.u32 %v1714, 7
        %v1716 = vsub.s32 0, %v1715
        %v1717 = vrot.slane %v1712, %v1716
        %v1718 = vlaneseq
        %v1719 = vshrl.u32 %v1718, 7
        %v1720 = vsub.s32 1, %v1719
        %v1721 = vrot.slane %v1712, %v1720
        %v1722 = vlaneseq
        %v1723 = vshrl.u32 %v1722, 7
        %v1724 = vsub.s32 2, %v1723
        %v1725 = vrot.slane %v1712, %v1724
        %v1726 = vlaneseq
        %v1727 = vshrl.u32 %v1726, 7
        %v1728 = vsub.s32 3, %v1727
        %v1729 = vrot.slane %v1712, %v1728
        %v1734 = vsel %vm138, %v1717, -inf
        %v1735 = vsel %vm138, %v1721, -inf
        %v1736 = vsel %vm138, %v1725, -inf
        %v1737 = vsel %vm138, %v1729, -inf
        %v1738 = vmax.f32 %v1734, %v1735
        %v1739 = vmax.f32 %v1736, %v1737
        %v1740 = vmax.f32 %v1738, %v1739
        %1741 = vmax.xlane.f32.xlu0 %v1740
        %v1742 = vpop.xlane.xlu0 %1741
        %v1743 = vrot.slane %v1742, 4
        %v1744 = vmax.f32 %v1742, %v1743
        %v1745 = vrot.slane %v1744, 2
        %v1746 = vmax.f32 %v1744, %v1745
        %v1747 = vrot.slane %v1746, 1
        %v1748 = vmax.f32 %v1746, %v1747
        %s1749 = vtos %v1748
        %v1750 = vstv %s1749
        %v1751 = vmul.f32 %v1750, 1.442695
        %v1752 = vpow.pop %v1751
        %s1753 = vtos %v1752
        %v1754 = vsel %vm113, %v115, -inf
        %v1756 = vlaneseq
        %v1757 = vshrl.u32 %v1756, 7
        %v1758 = vsub.s32 0, %v1757
        %v1759 = vrot.slane %v1754, %v1758
        %v1760 = vlaneseq
        %v1761 = vshrl.u32 %v1760, 7
        %v1762 = vsub.s32 1, %v1761
        %v1763 = vrot.slane %v1754, %v1762
        %v1764 = vlaneseq
        %v1765 = vshrl.u32 %v1764, 7
        %v1766 = vsub.s32 2, %v1765
        %v1767 = vrot.slane %v1754, %v1766
        %v1768 = vlaneseq
        %v1769 = vshrl.u32 %v1768, 7
        %v1770 = vsub.s32 3, %v1769
        %v1771 = vrot.slane %v1754, %v1770
        %v1776 = vsel %vm138, %v1759, -inf
        %v1777 = vsel %vm138, %v1763, -inf
        %v1778 = vsel %vm138, %v1767, -inf
        %v1779 = vsel %vm138, %v1771, -inf
        %v1780 = vmax.f32 %v1776, %v1777
        %v1781 = vmax.f32 %v1778, %v1779
        %v1782 = vmax.f32 %v1780, %v1781
        %1783 = vmax.xlane.f32.xlu0 %v1782
        %v1784 = vpop.xlane.xlu0 %1783
        %v1785 = vrot.slane %v1784, 4
        %v1786 = vmax.f32 %v1784, %v1785
        %v1787 = vrot.slane %v1786, 2
        %v1788 = vmax.f32 %v1786, %v1787
        %v1789 = vrot.slane %v1788, 1
        %v1790 = vmax.f32 %v1788, %v1789
        %s1791 = vtos %v1790
        %v1792 = vstv %s1791
        %v1793 = vsub.f32 %v115, %v1792
        %v1794 = vmul.f32 %v1793, 1.442695
        %v1795 = vpow.pop %v1794
        %v1796 = vsel %vm1671, %v1795, 0.0
        %s1797 = ssub.f32 %s1753, %s1791
        %v1798 = vstv %s1797
        %v1799 = vmul.f32 %v1798, 1.442695
        %v1800 = vpow.pop %v1799
        %s1801 = vtos %v1800
        %v1803 = vlaneseq
        %v1804 = vshrl.u32 %v1803, 7
        %v1805 = vsub.s32 0, %v1804
        %v1806 = vrot.slane %v1796, %v1805
        %v1807 = vlaneseq
        %v1808 = vshrl.u32 %v1807, 7
        %v1809 = vsub.s32 1, %v1808
        %v1810 = vrot.slane %v1796, %v1809
        %v1811 = vlaneseq
        %v1812 = vshrl.u32 %v1811, 7
        %v1813 = vsub.s32 2, %v1812
        %v1814 = vrot.slane %v1796, %v1813
        %v1815 = vlaneseq
        %v1816 = vshrl.u32 %v1815, 7
        %v1817 = vsub.s32 3, %v1816
        %v1818 = vrot.slane %v1796, %v1817
        %v1823 = vsel %vm138, %v1806, 0.0
        %v1824 = vsel %vm138, %v1810, 0.0
        %v1825 = vadd.f32 %v1823, %v1824
        %v1826 = vsel %vm138, %v1814, 0.0
        %v1827 = vadd.f32 %v1825, %v1826
        %v1828 = vsel %vm138, %v1818, 0.0
        %v1829 = vadd.f32 %v1827, %v1828
        %1830 = vadd.xlane.f32.xlu0 %v1829
        %v1831 = vpop.xlane.xlu0 %1830
        %v1832 = vrot.slane %v1831, 4
        %v1833 = vadd.f32 %v1831, %v1832
        %v1834 = vrot.slane %v1833, 2
        %v1835 = vadd.f32 %v1833, %v1834
        %v1836 = vrot.slane %v1835, 1
        %v1837 = vadd.f32 %v1835, %v1836
        %s1838 = vtos %v1837
        %s1839 = smul.f32 %s1710, %s1801
        %s1840 = sadd.f32 %s1838, %s1839
        %v1841 = vsel %vm1671, %v115, 0.0
        %v1842 = vmul.f32 %v1841, %v1796
        %v1844 = vlaneseq
        %v1845 = vshrl.u32 %v1844, 7
        %v1846 = vsub.s32 0, %v1845
        %v1847 = vrot.slane %v1842, %v1846
        %v1848 = vlaneseq
        %v1849 = vshrl.u32 %v1848, 7
        %v1850 = vsub.s32 1, %v1849
        %v1851 = vrot.slane %v1842, %v1850
        %v1852 = vlaneseq
        %v1853 = vshrl.u32 %v1852, 7
        %v1854 = vsub.s32 2, %v1853
        %v1855 = vrot.slane %v1842, %v1854
        %v1856 = vlaneseq
        %v1857 = vshrl.u32 %v1856, 7
        %v1858 = vsub.s32 3, %v1857
        %v1859 = vrot.slane %v1842, %v1858
        %v1864 = vsel %vm138, %v1847, 0.0
        %v1865 = vsel %vm138, %v1851, 0.0
        %v1866 = vadd.f32 %v1864, %v1865
        %v1867 = vsel %vm138, %v1855, 0.0
        %v1868 = vadd.f32 %v1866, %v1867
        %v1869 = vsel %vm138, %v1859, 0.0
        %v1870 = vadd.f32 %v1868, %v1869
        %1871 = vadd.xlane.f32.xlu0 %v1870
        %v1872 = vpop.xlane.xlu0 %1871
        %v1873 = vrot.slane %v1872, 4
        %v1874 = vadd.f32 %v1872, %v1873
        %v1875 = vrot.slane %v1874, 2
        %v1876 = vadd.f32 %v1874, %v1875
        %v1877 = vrot.slane %v1876, 1
        %v1878 = vadd.f32 %v1876, %v1877
        %s1879 = vtos %v1878
        %s1880 = smul.f32 %s1710, %s1753
        %s1881 = smul.f32 %s1880, %s1801
        %s1882 = sadd.f32 %s1879, %s1881
        %v1883 = vstv %s1840
        %v1884 = vrcp.pop %v1883
        %s1885 = vtos %v1884
        %s1886 = smul.f32 %s1882, %s1885
        %s1887 = scalar_select %p281, %s235, 1.0
        %s1888 = ssub.f32 %s1886, %s1887
        %s1889 = sadd.f32 %s1888, 0.5
        %s1890 = smul.f32 %s1889, 4.0
        %s1891 = smax.f32 %s1890, 0.0
        %s1892 = sand.u32 2147483647, %s1890
        %s1893 = ssub.f32 0.0, %s1892
        %v1894 = vstv %s1893
        %v1895 = vmul.f32 %v1894, 1.442695
        %v1896 = vpow.pop %v1895
        %s1897 = vtos %v1896
        %s1898 = sadd.f32 %s1897, 1.0
        %v1899 = vstv %s1898
        %v1900 = vlog2.pop %v1899
        %v1901 = vmul.f32 %v1900, 0.6931472
        %s1902 = vtos %v1901
        %s1903 = sadd.f32 %s1891, %s1902
        %v1904 = vrcp.pop 4.0
        %s1905 = vtos %v1904
        %s1906 = smul.f32 %s1903, %s1905
        %v1907 = vlaneseq
        %v1908 = vand.u32 %v1907, 127
        %vm1909 = vcmp.eq.s32.totalorder %v1908, 0
        %vm1910 = vcmp.eq.s32.totalorder %v1908, 1
        %v1911 = vsel %vm1910, 1.0, 0.0
        %v1912 = vstv %s1906
        %v1913 = vsel %vm1909, %v1912, %v1911
        %1914 = vst [vmem:[%s109] sm:$0x1] %v1913
      $region28: #{rank_cls_loss.1} parent=23 // pred_fallthru
        _
      %p1915 = scmp.lt.s32.totalorder %s12, 1
      %s1916 = scalar_select %p1915, %s12, 1
      %s1917 = scalar_lea.vmem %s1, %s1916
      // Predicated region
      $region29: #{rank_cls_loss.1} parent=23 // pred_check
        %p1918 = pneg %p56
      $region30: #{rank_cls_loss.1} parent=23 // pred_check_branch
        %1920 = sbr.rel (%p1918) target = $region32
      $region31: #{rank_cls_loss.1} parent=23 // pred_region
        _
      $region32: #{rank_cls_loss.1} parent=23 // pred_fallthru
        _
    $region24: #{rank_cls_loss.1} parent=5 // pred_fallthru
      _
    %p1921 = scmp.le.s32.totalorder 2, %s7
    // Predicated region
    $region33: #{rank_cls_loss.1} parent=5 // pred_check
      %p1922 = pneg %p1921
    $region34: #{rank_cls_loss.1} parent=5 // pred_check_branch
      %1924 = sbr.rel (%p1922) target = $region36
    $region35: #{rank_cls_loss.1} parent=5 // pred_region
      %s1925 = ssub.s32 %s7, 2
      // Predicated region
      $region37: #{rank_cls_loss.1} parent=35 // pred_check
        %p1926 = pneg %p62
      $region38: #{rank_cls_loss.1} parent=35 // pred_check_branch
        %1928 = sbr.rel (%p1926) target = $region40
      $region39: #{rank_cls_loss.1} parent=35 // pred_region
        %p1929 = scmp.lt.s32.totalorder %s13, 1
        %s1930 = scalar_select %p1929, %s13, 1
        %s1931 = scalar_lea.vmem %s1, %s1930
      $region40: #{rank_cls_loss.1} parent=35 // pred_fallthru
        _
    $region36: #{rank_cls_loss.1} parent=5 // pred_fallthru
      _
  $region6: #{rank_cls_loss.1} parent=0 // loop_footer
    %s11 = sadd.s32 1, %s7
  $region7: #{rank_cls_loss.1} parent=0 // loop_footer_branch
    %6 = sbr.rel target = $region3
  $region8: #{rank_cls_loss.1} parent=0 // loop_exit
    _

</llo_original>
